<compile_context>
chip_gen: v5e
topology: v5e:2x2
jax: 0.10.0
libtpu: 0.0.40
codegen_flags: <defaults>
</compile_context>

<pallas_src>
import functools
import math

import jax
import jax.numpy as jnp
from jax.experimental import pallas as pl
from jax.experimental.pallas import tpu as pltpu

_VMEM_LIMIT = 32 * 1024 * 1024


def _round_up(x, m):
    return (x + m - 1) // m * m


def _pick_tm(m, bytes_per_row, cap=1024, budget=6 * 2 ** 20):
    """Largest multiple-of-8 row tile <= cap whose block stays under budget."""
    tm = min(cap, _round_up(m, 8))
    while tm > 8 and tm * bytes_per_row > budget:
        tm = max(8, _round_up(tm // 2, 8))
    return tm


# ----------------------------------------------------------------------------
# Pallas kernels
# ----------------------------------------------------------------------------

def _gmm_kernel(a_ref, w_ref, o_ref):
    """Grouped matmul: (1, tm, Kg) @ (1, Kg, cog) -> (1, tm, cog)."""
    o_ref[0] = jnp.dot(a_ref[0], w_ref[0],
                       preferred_element_type=jnp.float32).astype(o_ref.dtype)


def _bn_conv1x1_kernel(x_ref, ss_ref, w_ref, o_ref):
    """Fused BN(affine)+ReLU+1x1x1-conv: relu(x*scale+shift) @ W."""
    x = x_ref[...].astype(jnp.float32)
    h = jnp.maximum(x * ss_ref[0:1, :] + ss_ref[1:2, :], 0.0)
    o_ref[...] = jnp.dot(h.astype(jnp.bfloat16), w_ref[...],
                         preferred_element_type=jnp.float32).astype(o_ref.dtype)


def _bn_stats_kernel(x_ref, g_ref, b_ref, o_ref, acc_ref, *, inv_count, eps):
    """Per-channel sum / sumsq reduction -> (scale, shift) (training-mode BN)."""
    i = pl.program_id(0)

    @pl.when(i == 0)
    def _():
        acc_ref[...] = jnp.zeros_like(acc_ref)

    x = x_ref[...].astype(jnp.float32)
    acc_ref[0:1, :] += jnp.sum(x, axis=0, keepdims=True)
    acc_ref[1:2, :] += jnp.sum(x * x, axis=0, keepdims=True)

    @pl.when(i == pl.num_programs(0) - 1)
    def _():
        mean = acc_ref[0:1, :] * inv_count
        var = jnp.maximum(acc_ref[1:2, :] * inv_count - mean * mean, 0.0)
        scale = g_ref[...] * jax.lax.rsqrt(var + eps)
        o_ref[0:1, :] = scale
        o_ref[1:2, :] = b_ref[...] - mean * scale


def _bn_apply_kernel(x_ref, ss_ref, o_ref):
    x = x_ref[...].astype(jnp.float32)
    o_ref[...] = jnp.maximum(x * ss_ref[0:1, :] + ss_ref[1:2, :],
                             0.0).astype(o_ref.dtype)


def _max_kernel(x_ref, o_ref):
    o_ref[...] = jnp.max(x_ref[...], axis=0)


def _avg_kernel(x_ref, o_ref, *, inv_count):
    o_ref[...] = jnp.sum(x_ref[...].astype(jnp.float32), axis=1) * inv_count


# ----------------------------------------------------------------------------
# Pallas wrappers
# ----------------------------------------------------------------------------

@functools.partial(jax.jit, static_argnames=("out_dtype",))
def pallas_grouped_matmul(a, w, out_dtype=jnp.bfloat16):
    """a: (G, M, Kg) bf16, w: (G, Kg, cog) bf16 -> (G, M, cog)."""
    g, m, k = a.shape
    cog = w.shape[2]
    tm = _pick_tm(m, k * a.dtype.itemsize)
    mp = _round_up(m, tm)
    if mp != m:
        a = jnp.pad(a, ((0, 0), (0, mp - m), (0, 0)))
    out = pl.pallas_call(
        _gmm_kernel,
        out_shape=jax.ShapeDtypeStruct((g, mp, cog), out_dtype),
        grid_spec=pltpu.PrefetchScalarGridSpec(
            num_scalar_prefetch=0,
            grid=(mp // tm, g),
            in_specs=[
                pl.BlockSpec((1, tm, k), lambda i, gg: (gg, i, 0)),
                pl.BlockSpec((1, k, cog), lambda i, gg: (gg, 0, 0)),
            ],
            out_specs=pl.BlockSpec((1, tm, cog), lambda i, gg: (gg, i, 0)),
        ),
        compiler_params=pltpu.CompilerParams(
            dimension_semantics=("parallel", "parallel"),
            vmem_limit_bytes=_VMEM_LIMIT),
    )(a, w)
    return out[:, :m, :]


@jax.jit
def pallas_bn_relu_matmul(x2, ss, w):
    """x2: (M, Cin) bf16, ss: (2, Cin) f32, w: (Cin, Cout) bf16 -> (M, Cout)."""
    m, c_in = x2.shape
    c_out = w.shape[1]
    tm = _pick_tm(m, c_in * x2.dtype.itemsize)
    mp = _round_up(m, tm)
    if mp != m:
        x2 = jnp.pad(x2, ((0, mp - m), (0, 0)))
    out = pl.pallas_call(
        _bn_conv1x1_kernel,
        out_shape=jax.ShapeDtypeStruct((mp, c_out), jnp.bfloat16),
        grid_spec=pltpu.PrefetchScalarGridSpec(
            num_scalar_prefetch=0,
            grid=(mp // tm,),
            in_specs=[
                pl.BlockSpec((tm, c_in), lambda i: (i, 0)),
                pl.BlockSpec((2, c_in), lambda i: (0, 0)),
                pl.BlockSpec((c_in, c_out), lambda i: (0, 0)),
            ],
            out_specs=pl.BlockSpec((tm, c_out), lambda i: (i, 0)),
        ),
        compiler_params=pltpu.CompilerParams(
            dimension_semantics=("parallel",),
            vmem_limit_bytes=_VMEM_LIMIT),
    )(x2, ss, w)
    return out[:m]


@jax.jit
def pallas_bn_scale_shift(x2, gamma, beta):
    """x2: (M, C) -> (2, C) f32 holding [scale; shift] (training-mode BN)."""
    m, c = x2.shape
    tm = _pick_tm(m, c * x2.dtype.itemsize)
    mp = _round_up(m, tm)
    if mp != m:
        x2 = jnp.pad(x2, ((0, mp - m), (0, 0)))
    kernel = functools.partial(_bn_stats_kernel, inv_count=1.0 / m, eps=1e-5)
    return pl.pallas_call(
        kernel,
        out_shape=jax.ShapeDtypeStruct((2, c), jnp.float32),
        grid_spec=pltpu.PrefetchScalarGridSpec(
            num_scalar_prefetch=0,
            grid=(mp // tm,),
            in_specs=[
                pl.BlockSpec((tm, c), lambda i: (i, 0)),
                pl.BlockSpec((1, c), lambda i: (0, 0)),
                pl.BlockSpec((1, c), lambda i: (0, 0)),
            ],
            out_specs=pl.BlockSpec((2, c), lambda i: (0, 0)),
            scratch_shapes=[pltpu.VMEM((2, c), jnp.float32)],
        ),
        compiler_params=pltpu.CompilerParams(
            dimension_semantics=("arbitrary",),
            vmem_limit_bytes=_VMEM_LIMIT),
    )(x2, gamma.reshape(1, c).astype(jnp.float32),
      beta.reshape(1, c).astype(jnp.float32))


@jax.jit
def pallas_bn_relu_apply(x2, ss):
    """Single-pass normalize + ReLU: (M, C) bf16 -> (M, C) bf16."""
    m, c = x2.shape
    tm = _pick_tm(m, c * x2.dtype.itemsize)
    mp = _round_up(m, tm)
    if mp != m:
        x2 = jnp.pad(x2, ((0, mp - m), (0, 0)))
    out = pl.pallas_call(
        _bn_apply_kernel,
        out_shape=jax.ShapeDtypeStruct((mp, c), jnp.bfloat16),
        grid_spec=pltpu.PrefetchScalarGridSpec(
            num_scalar_prefetch=0,
            grid=(mp // tm,),
            in_specs=[
                pl.BlockSpec((tm, c), lambda i: (i, 0)),
                pl.BlockSpec((2, c), lambda i: (0, 0)),
            ],
            out_specs=pl.BlockSpec((tm, c), lambda i: (i, 0)),
        ),
        compiler_params=pltpu.CompilerParams(
            dimension_semantics=("parallel",),
            vmem_limit_bytes=_VMEM_LIMIT),
    )(x2, ss)
    return out[:m]


@jax.jit
def pallas_max_over_first(x3):
    """x3: (P, M, L) -> elementwise max over P."""
    p, m, l = x3.shape
    tm = _pick_tm(m, p * l * x3.dtype.itemsize)
    mp = _round_up(m, tm)
    if mp != m:
        x3 = jnp.pad(x3, ((0, 0), (0, mp - m), (0, 0)))
    out = pl.pallas_call(
        _max_kernel,
        out_shape=jax.ShapeDtypeStruct((mp, l), x3.dtype),
        grid_spec=pltpu.PrefetchScalarGridSpec(
            num_scalar_prefetch=0,
            grid=(mp // tm,),
            in_specs=[pl.BlockSpec((p, tm, l), lambda i: (0, i, 0))],
            out_specs=pl.BlockSpec((tm, l), lambda i: (i, 0)),
        ),
        compiler_params=pltpu.CompilerParams(
            dimension_semantics=("parallel",),
            vmem_limit_bytes=_VMEM_LIMIT),
    )(x3)
    return out[:m]


@jax.jit
def pallas_global_avgpool(x3):
    """x3: (N, M, C) -> (N, C) mean over M (global average pool)."""
    n, m, c = x3.shape
    mp = _round_up(m, 8)
    if mp != m:
        x3 = jnp.pad(x3, ((0, 0), (0, mp - m), (0, 0)))
    kernel = functools.partial(_avg_kernel, inv_count=1.0 / m)
    return pl.pallas_call(
        kernel,
        out_shape=jax.ShapeDtypeStruct((n, c), jnp.float32),
        grid_spec=pltpu.PrefetchScalarGridSpec(
            num_scalar_prefetch=0,
            grid=(1,),
            in_specs=[pl.BlockSpec((n, mp, c), lambda i: (0, 0, 0))],
            out_specs=pl.BlockSpec((n, c), lambda i: (0, 0)),
        ),
        compiler_params=pltpu.CompilerParams(
            dimension_semantics=("arbitrary",),
            vmem_limit_bytes=_VMEM_LIMIT),
    )(x3)


# ----------------------------------------------------------------------------
# Conv3d = group-blocked im2col (JAX glue) + grouped Pallas matmul
# ----------------------------------------------------------------------------

@functools.partial(jax.jit, static_argnames=("kernel", "stride", "pad", "groups"))
def conv3d_grouped(h5, w_gkc, *, kernel, stride, pad, groups):
    """h5: (N,T,H,W,C) bf16, w_gkc: (G, cig*P, cog) bf16 -> NTHWC output."""
    n, t, hh, ww, c = h5.shape
    kt, kh, kw = kernel
    st, sh, sw = stride
    pt, ph, pw = pad
    if pt or ph or pw:
        h5 = jnp.pad(h5, ((0, 0), (pt, pt), (ph, ph), (pw, pw), (0, 0)))
    ot = (t + 2 * pt - kt) // st + 1
    oh = (hh + 2 * ph - kh) // sh + 1
    ow = (ww + 2 * pw - kw) // sw + 1
    taps = []
    for dt in range(kt):
        xt = jax.lax.slice_in_dim(h5, dt, dt + (ot - 1) * st + 1, st, axis=1)
        for dh in range(kh):
            xh = jax.lax.slice_in_dim(xt, dh, dh + (oh - 1) * sh + 1, sh, axis=2)
            for dw in range(kw):
                taps.append(
                    jax.lax.slice_in_dim(xh, dw, dw + (ow - 1) * sw + 1, sw,
                                         axis=3))
    p = len(taps)
    # (N,ot,oh,ow,C,P): channel-major / tap-minor so each group's K is contiguous
    stk = jnp.stack(taps, axis=-1)
    m = n * ot * oh * ow
    cig = c // groups
    a = stk.reshape(m, groups, cig * p)
    a = jnp.swapaxes(a, 0, 1)                       # (G, M, Kg)
    out = pallas_grouped_matmul(a, w_gkc)           # (G, M, cog)
    cog = w_gkc.shape[2]
    out = jnp.swapaxes(out, 0, 1).reshape(n, ot, oh, ow, groups * cog)
    return out


@jax.jit
def maxpool3d_133(x5):
    """MaxPool3d(kernel=(1,3,3), stride=(1,2,2), padding=(0,1,1))."""
    n, t, hh, ww, c = x5.shape
    neg = float(jnp.finfo(jnp.bfloat16).min)
    xp = jnp.pad(x5, ((0, 0), (0, 0), (1, 1), (1, 1), (0, 0)),
                 constant_values=neg)
    oh = (hh + 2 - 3) // 2 + 1
    ow = (ww + 2 - 3) // 2 + 1
    taps = []
    for dh in range(3):
        xh = jax.lax.slice_in_dim(xp, dh, dh + (oh - 1) * 2 + 1, 2, axis=2)
        for dw in range(3):
            taps.append(jax.lax.slice_in_dim(xh, dw, dw + (ow - 1) * 2 + 1, 2,
                                             axis=3))
    stk = jnp.stack(taps, axis=0).reshape(9, n * t * oh, ow * c)
    out = pallas_max_over_first(stk)
    return out.reshape(n, t, oh, ow, c)


# ----------------------------------------------------------------------------
# Parameters (Xavier init, weights pre-converted to kernel-ready bf16 layouts)
# ----------------------------------------------------------------------------

def _xavier_conv(key, c_out, c_in_g, kernel):
    kt, kh, kw = kernel
    fan_in = c_in_g * kt * kh * kw
    fan_out = c_out * kt * kh * kw
    limit = math.sqrt(6.0 / (fan_in + fan_out))
    return jax.random.uniform(key, (c_out, c_in_g, kt, kh, kw), jnp.float32,
                              -limit, limit)


def _w_grouped_layout(w, groups):
    c_out, cig, kt, kh, kw = w.shape
    p = kt * kh * kw
    cog = c_out // groups
    w = w.reshape(groups, cog, cig, p)
    w = jnp.transpose(w, (0, 2, 3, 1)).reshape(groups, cig * p, cog)
    return w.astype(jnp.bfloat16)


def _w_1x1_layout(w):
    c_out, c_in = w.shape[0], w.shape[1]
    return jnp.transpose(w.reshape(c_out, c_in)).astype(jnp.bfloat16)


def _init_bac_1x1(key, num_in, num_filter):
    return {"gamma": jnp.ones((num_in,), jnp.float32),
            "beta": jnp.zeros((num_in,), jnp.float32),
            "w": _w_1x1_layout(_xavier_conv(key, num_filter, num_in, (1, 1, 1)))}


def _init_bac_grouped(key, num_in, num_filter, kernel, g):
    return {"gamma": jnp.ones((num_in,), jnp.float32),
            "beta": jnp.zeros((num_in,), jnp.float32),
            "w": _w_grouped_layout(
                _xavier_conv(key, num_filter, num_in // g, kernel), g)}


def _init_mf_unit(key, num_in, num_mid, num_out, g, first):
    ks = jax.random.split(key, 5)
    num_ix = num_mid // 4
    p = {
        "i1": _init_bac_1x1(ks[0], num_in, num_ix),
        "i2": _init_bac_1x1(ks[1], num_ix, num_in),
        "m1": _init_bac_grouped(ks[2], num_in, num_mid, (3, 3, 3), g),
    }
    if first:
        p["m2"] = _init_bac_1x1(ks[3], num_mid, num_out)
        p["w1"] = _init_bac_1x1(ks[4], num_in, num_out)
    else:
        p["m2"] = _init_bac_grouped(ks[3], num_mid, num_out, (1, 3, 3), g)
    return p


def init_mfnet_params(key, num_classes=10):
    groups = 16
    k_sec = {2: 3, 3: 4, 4: 6, 5: 3}
    num_outs = {1: 16, 2: 96, 3: 192, 4: 384, 5: 768}
    num_mids = {2: 96, 3: 192, 4: 384, 5: 768}
    keys = iter(jax.random.split(key, 64))
    params = {
        "conv1_w": _w_grouped_layout(_xavier_conv(next(keys), 16, 3, (3, 5, 5)), 1),
        "bn1_g": jnp.ones((16,), jnp.float32),
        "bn1_b": jnp.zeros((16,), jnp.float32),
    }
    for s in (2, 3, 4, 5):
        units = []
        for i in range(1, k_sec[s] + 1):
            first = (i == 1)
            num_in = num_outs[s - 1] if first else num_outs[s]
            stride = ((2, 1, 1) if s == 2 else (1, 2, 2)) if first else (1, 1, 1)
            up = _init_mf_unit(next(keys), num_in, num_mids[s], num_outs[s],
                               groups, first)
            units.append((up, {"g": groups, "stride": stride, "first": first}))
        params["conv%d" % s] = units
    params["tail_g"] = jnp.ones((768,), jnp.float32)
    params["tail_b"] = jnp.zeros((768,), jnp.float32)
    limit = math.sqrt(6.0 / (768 + num_classes))
    fc_w = jax.random.uniform(next(keys), (num_classes, 768), jnp.float32,
                              -limit, limit)
    params["fc_w"] = jnp.transpose(fc_w)[None].astype(jnp.bfloat16)  # (1,768,nc)
    params["fc_b"] = jnp.zeros((num_classes,), jnp.float32)
    return params


# ----------------------------------------------------------------------------
# Forward pass
# ----------------------------------------------------------------------------

def _bn_ac_conv_1x1(x5, p, stride=(1, 1, 1)):
    n, t, hh, ww, c = x5.shape
    ss = pallas_bn_scale_shift(x5.reshape(-1, c), p["gamma"], p["beta"])
    st, sh, sw = stride
    xs = x5[:, ::st, ::sh, ::sw, :]
    n2, t2, h2, w2, _ = xs.shape
    out = pallas_bn_relu_matmul(xs.reshape(-1, c), ss, p["w"])
    return out.reshape(n2, t2, h2, w2, -1)


def _bn_ac_conv_spatial(x5, p, *, kernel, stride, pad, groups):
    n, t, hh, ww, c = x5.shape
    ss = pallas_bn_scale_shift(x5.reshape(-1, c), p["gamma"], p["beta"])
    h5 = pallas_bn_relu_apply(x5.reshape(-1, c), ss).reshape(n, t, hh, ww, c)
    return conv3d_grouped(h5, p["w"], kernel=kernel, stride=stride, pad=pad,
                          groups=groups)


def _mf_unit_forward(x, p, cfg):
    g, stride, first = cfg["g"], cfg["stride"], cfg["first"]
    h = _bn_ac_conv_1x1(x, p["i1"])
    x_in = x + _bn_ac_conv_1x1(h, p["i2"])
    h = _bn_ac_conv_spatial(x_in, p["m1"], kernel=(3, 3, 3), stride=stride,
                            pad=(1, 1, 1), groups=g)
    if first:
        h = _bn_ac_conv_1x1(h, p["m2"])
        x = _bn_ac_conv_1x1(x, p["w1"], stride=stride)
    else:
        h = _bn_ac_conv_spatial(h, p["m2"], kernel=(1, 3, 3), stride=(1, 1, 1),
                                pad=(0, 1, 1), groups=g)
    return h + x


def mfnet_forward(params, x):
    """x: PyTorch NCDHW (N, 3, 16, H, W). Returns (N, num_classes)."""
    assert x.shape[2] == 16
    h = jnp.transpose(x, (0, 2, 3, 4, 1)).astype(jnp.bfloat16)       # NTHWC
    h = conv3d_grouped(h, params["conv1_w"], kernel=(3, 5, 5),
                       stride=(1, 2, 2), pad=(1, 2, 2), groups=1)
    n, t, hh, ww, c = h.shape
    ss = pallas_bn_scale_shift(h.reshape(-1, c), params["bn1_g"], params["bn1_b"])
    h = pallas_bn_relu_apply(h.reshape(-1, c), ss).reshape(n, t, hh, ww, c)
    h = maxpool3d_133(h)
    for s in (2, 3, 4, 5):
        for up, cfg in params["conv%d" % s]:
            h = _mf_unit_forward(h, up, cfg)
    n, t, hh, ww, c = h.shape
    ss = pallas_bn_scale_shift(h.reshape(-1, c), params["tail_g"], params["tail_b"])
    h = pallas_bn_relu_apply(h.reshape(-1, c), ss).reshape(n, t, hh, ww, c)
    # Global average pool == AvgPool3d((8,7,7)) for the canonical 224x224 input.
    feat = pallas_global_avgpool(h.reshape(n, t * hh * ww, c))        # (N, 768)
    logits = pallas_grouped_matmul(feat[None].astype(jnp.bfloat16),
                                   params["fc_w"], out_dtype=jnp.float32)[0]
    return logits + params["fc_b"]


if __name__ == "__main__":
    key = jax.random.PRNGKey(0)
    pkey, xkey = jax.random.split(key)
    params = init_mfnet_params(pkey, num_classes=10)
    # Temporal extent must be 16 (module assert); canonical spatial size is
    # 224 but we run a small 32x32 demo input to keep the script fast.
    x = jax.random.normal(xkey, (1, 3, 16, 32, 32), jnp.float32)
    logits = mfnet_forward(params, x)
    jax.block_until_ready(logits)
    print("KERNEL_OK")
</pallas_src>

<mosaic_0001>
module attributes {stable_mosaic.version = 11 : i64} {
  func.func @_gmm_kernel(%arg0: i32, %arg1: i32, %arg2: memref<1x1024x225xbf16, #tpu.memory_space<vmem>>, %arg3: memref<1x225x16xbf16, #tpu.memory_space<vmem>>, %arg4: memref<1x1024x16xbf16, #tpu.memory_space<vmem>>) attributes {dimension_semantics = [#tpu.dimension_semantics<parallel>, #tpu.dimension_semantics<parallel>], iteration_bounds = array<i64: 4, 1>, scalar_prefetch = 0 : i64, scratch_operands = 0 : i64, tpu.core_type = #tpu.core_type<tc>, window_params = [{transform_indices = @transform_0, window_bounds = array<i64: 1, 1024, 225>}, {transform_indices = @transform_1, window_bounds = array<i64: 1, 225, 16>}, {transform_indices = @transform_2, window_bounds = array<i64: 1, 1024, 16>}]} {
    %c0 = arith.constant 0 : index
    %c0_0 = arith.constant 0 : index
    %c0_1 = arith.constant 0 : index
    %0 = vector.load %arg2[%c0, %c0_0, %c0_1] : memref<1x1024x225xbf16, #tpu.memory_space<vmem>>, vector<1x1024x225xbf16>
    %1 = vector.shape_cast %0 : vector<1x1024x225xbf16> to vector<1024x225xbf16>
    %c0_2 = arith.constant 0 : index
    %c0_3 = arith.constant 0 : index
    %c0_4 = arith.constant 0 : index
    %2 = vector.load %arg3[%c0_2, %c0_3, %c0_4] : memref<1x225x16xbf16, #tpu.memory_space<vmem>>, vector<1x225x16xbf16>
    %3 = vector.shape_cast %2 : vector<1x225x16xbf16> to vector<225x16xbf16>
    %cst = arith.constant dense<0.000000e+00> : vector<1024x16xf32>
    %4 = tpu.matmul %1, %3, %cst {dimension_numbers = #tpu.dot_dimension_numbers<[1], [0], [0], [1], [0, 0, 1, 1], [], []>} : vector<1024x225xbf16>, vector<225x16xbf16>, vector<1024x16xf32> -> vector<1024x16xf32>
    %5 = arith.truncf %4 : vector<1024x16xf32> to vector<1024x16xbf16>
    %c0_5 = arith.constant 0 : index
    %c0_6 = arith.constant 0 : index
    %c0_7 = arith.constant 0 : index
    %6 = vector.load %arg4[%c0_5, %c0_6, %c0_7] : memref<1x1024x16xbf16, #tpu.memory_space<vmem>>, vector<1x1024x16xbf16>
    %7 = vector.shape_cast %6 : vector<1x1024x16xbf16> to vector<1024x16xbf16>
    %8 = vector.shape_cast %5 : vector<1024x16xbf16> to vector<1x1024x16xbf16>
    tpu.vector_store %arg4[%c0_5, %c0_6, %c0_7], %8 {strides = array<i32>} : memref<1x1024x16xbf16, #tpu.memory_space<vmem>>, vector<1x1024x16xbf16>,
    return
  }
  func.func @transform_0(%arg0: i32, %arg1: i32) -> (i32, i32, i32) {
    %c0_i32 = arith.constant 0 : i32
    %c0_i32_0 = arith.constant 0 : i32
    return %arg1, %arg0, %c0_i32 : i32, i32, i32
  }
  func.func @transform_1(%arg0: i32, %arg1: i32) -> (i32, i32, i32) {
    %c0_i32 = arith.constant 0 : i32
    %c0_i32_0 = arith.constant 0 : i32
    %c0_i32_1 = arith.constant 0 : i32
    return %arg1, %c0_i32, %c0_i32_0 : i32, i32, i32
  }
  func.func @transform_2(%arg0: i32, %arg1: i32) -> (i32, i32, i32) {
    %c0_i32 = arith.constant 0 : i32
    %c0_i32_0 = arith.constant 0 : i32
    return %arg1, %arg0, %c0_i32 : i32, i32, i32
  }
}

</mosaic_0001>

<llo_original>
// kernel: pallas_grouped_matmul.1
$region0: #{pallas_grouped_matmul.1}
  #allocation0 [shape = 'u32[]', space=smem, size = 0x4, offset = 0x4, fixed_abs, tag = 'smem constant byte address 0x4 - core index']
  #allocation1 [shape = 'u32[72,128]{1,0:T(1,128)}', space=vmem, size = 0x9000, scoped, tag = 'internal scratch']
  %s0 = inlined_call_operand.vmem [shape: bf16[1,4096,225], index: 0, kind: input, shape index: {}]
  %s1 = inlined_call_operand.vmem [shape: bf16[1,225,16], index: 1, kind: input, shape index: {}]
  %s2 = inlined_call_operand.vmem [shape: bf16[1,4096,16], index: 2, kind: output, shape index: {}]
  %s3 = sld [smem:[#allocation0]]
  $region41: #{pallas_grouped_matmul.1} parent=0
    _
  %s5 = ssub.s32 1, %s3
  %s6 = scalar_select 0, %s5, %s3
  loop: start=0, step=1, limit=6
  $region2: #{pallas_grouped_matmul.1} parent=0 // loop_pre_header
    _
  $region3: #{pallas_grouped_matmul.1} parent=0 // loop_header
    %s8 = sphi 0, %s12
    %p9 = scmp.ge.s32.totalorder %s8, 6
    %s15 = sphi 0, %s27
    %s16 = sphi 0, %s23
    %s17 = sphi 0, %s15
    %s18 = sphi 0, %s16
    %s19 = sphi 0, %s17
    %s20 = sphi 0, %s18
    %s32 = sphi 0, %s34
    %s35 = sphi 0, %s32
    %s36 = sphi 0, %s35
    %s52 = sphi 0, %s36
    %s58 = sphi 0, %s60
    %s61 = sphi 0, %s58
    %s62 = sphi 0, %s61
    %s78 = sphi 0, %s62
    %s86 = sphi 0, %s88
    %s89 = sphi 0, %s86
    %s90 = sphi 0, %s89
    %s106 = sphi 0, %s90
  $region4: #{pallas_grouped_matmul.1} parent=0 // loop_header_branch
    %11 = sbr.rel (%p9) target = $region8
  $region5: #{pallas_grouped_matmul.1} parent=0 // loop_body
    %s13 = ssub.s32 %s8, 1
    %s14 = ssub.s32 %s8, 2
    %s21 = sadd.s32 1, %s16
    %p22 = scmp.ge.s32.totalorder %s21, 1
    %s23 = scalar_select %p22, 0, %s21
    %s24 = sadd.s32 1, %s15
    %s25 = scalar_select %p22, %s24, %s15
    %p26 = scmp.ge.s32.totalorder %s25, 4
    %s27 = scalar_select %p26, 0, %s25
    %s28 = ssub.s32 %s16, %s23
    %s29 = ssub.s32 %s15, %s27
    %s30 = sor.u32 %s28, %s29
    %p31 = scmp.eq.s32.totalorder %s30, 0
    %s33 = sadd.s32 %s32, 1
    %s34 = scalar_select %p31, %s32, %s33
    %p37 = pneg %p31
    %p38 = scmp.eq.s32.totalorder %s8, 3
    %p39 = por %p37, %p38
    %p40 = scmp.ne.s32.totalorder %s32, %s35
    %p41 = scmp.eq.s32.totalorder %s8, 0
    %p42 = por %p40, %p41
    %p43 = scmp.ne.s32.totalorder %s32, %s35
    %p44 = scmp.eq.s32.totalorder %s13, 3
    %p45 = por %p43, %p44
    %p46 = scmp.ne.s32.totalorder %s35, %s36
    %p47 = scmp.eq.s32.totalorder %s13, 0
    %p48 = por %p46, %p47
    %p49 = scmp.ne.s32.totalorder %s35, %s36
    %p50 = scmp.eq.s32.totalorder %s14, 3
    %p51 = por %p49, %p50
    %p53 = scmp.ne.s32.totalorder %s36, %s52
    %p54 = scmp.eq.s32.totalorder %s14, 0
    %p55 = por %p53, %p54
    %s56 = ssub.s32 %s16, %s23
    %p57 = scmp.eq.s32.totalorder %s56, 0
    %s59 = sadd.s32 %s58, 1
    %s60 = scalar_select %p57, %s58, %s59
    %p63 = pneg %p57
    %p64 = scmp.eq.s32.totalorder %s8, 3
    %p65 = por %p63, %p64
    %p66 = scmp.ne.s32.totalorder %s58, %s61
    %p67 = scmp.eq.s32.totalorder %s8, 0
    %p68 = por %p66, %p67
    %p69 = scmp.ne.s32.totalorder %s58, %s61
    %p70 = scmp.eq.s32.totalorder %s13, 3
    %p71 = por %p69, %p70
    %p72 = scmp.ne.s32.totalorder %s61, %s62
    %p73 = scmp.eq.s32.totalorder %s13, 0
    %p74 = por %p72, %p73
    %p75 = scmp.ne.s32.totalorder %s61, %s62
    %p76 = scmp.eq.s32.totalorder %s14, 3
    %p77 = por %p75, %p76
    %p79 = scmp.ne.s32.totalorder %s62, %s78
    %p80 = scmp.eq.s32.totalorder %s14, 0
    %p81 = por %p79, %p80
    %s82 = ssub.s32 %s16, %s23
    %s83 = ssub.s32 %s15, %s27
    %s84 = sor.u32 %s82, %s83
    %p85 = scmp.eq.s32.totalorder %s84, 0
    %s87 = sadd.s32 %s86, 1
    %s88 = scalar_select %p85, %s86, %s87
    %p91 = pneg %p85
    %p92 = scmp.eq.s32.totalorder %s8, 3
    %p93 = por %p91, %p92
    %p94 = scmp.ne.s32.totalorder %s86, %s89
    %p95 = scmp.eq.s32.totalorder %s8, 0
    %p96 = por %p94, %p95
    %p97 = scmp.ne.s32.totalorder %s86, %s89
    %p98 = scmp.eq.s32.totalorder %s13, 3
    %p99 = por %p97, %p98
    %p100 = scmp.ne.s32.totalorder %s89, %s90
    %p101 = scmp.eq.s32.totalorder %s13, 0
    %p102 = por %p100, %p101
    %p103 = scmp.ne.s32.totalorder %s89, %s90
    %p104 = scmp.eq.s32.totalorder %s14, 3
    %p105 = por %p103, %p104
    %p107 = scmp.ne.s32.totalorder %s90, %s106
    %p108 = scmp.eq.s32.totalorder %s14, 0
    %p109 = por %p107, %p108
    %p110 = scmp.le.s32.totalorder 1, %s8
    %p111 = scmp.lt.s32.totalorder %s8, 5
    %p112 = pnand %p110, %p111
    %p113 = pneg %p112
    // Predicated region
    $region9: #{pallas_grouped_matmul.1} parent=5 // pred_check
      _
    $region10: #{pallas_grouped_matmul.1} parent=5 // pred_check_branch
      %115 = sbr.rel (%p112) target = $region12
    $region11: #{pallas_grouped_matmul.1} parent=5 // pred_region
      %s116 = ssub.s32 %s8, 1
      // Predicated region
      $region13: #{pallas_grouped_matmul.1} parent=11 // pred_check
        %p117 = pneg %p74
      $region14: #{pallas_grouped_matmul.1} parent=11 // pred_check_branch
        %119 = sbr.rel (%p117) target = $region16
      $region15: #{pallas_grouped_matmul.1} parent=11 // pred_region
        %p120 = scmp.lt.s32.totalorder %s18, 0
        %s121 = scalar_select %p120, %s18, 0
        %s122 = smul.addr %s121, 29
        %s123 = smul.addr %s122, 4
        %s124 = scalar_lea.vmem %s1, %s123
      $region16: #{pallas_grouped_matmul.1} parent=11 // pred_fallthru
        _
    $region12: #{pallas_grouped_matmul.1} parent=5 // pred_fallthru
      _
    %p125 = scmp.lt.s32.totalorder %s8, 4
    // Predicated region
    $region17: #{pallas_grouped_matmul.1} parent=5 // pred_check
      %p126 = pneg %p125
    $region18: #{pallas_grouped_matmul.1} parent=5 // pred_check_branch
      %128 = sbr.rel (%p126) target = $region20
    $region19: #{pallas_grouped_matmul.1} parent=5 // pred_region
      // Predicated region
      $region21: #{pallas_grouped_matmul.1} parent=19 // pred_check
        %p129 = pneg %p42
      $region22: #{pallas_grouped_matmul.1} parent=19 // pred_check_branch
        %131 = sbr.rel (%p129) target = $region24
      $region23: #{pallas_grouped_matmul.1} parent=19 // pred_region
        %s132 = smul.u32 128, %s15
        %p133 = scmp.lt.s32.totalorder %s16, 0
        %s134 = scalar_select %p133, %s16, 0
        %p135 = scmp.lt.s32.totalorder %s132, 511
        %s136 = scalar_select %p135, %s132, 511
        %s137 = smul.addr %s136, 2
        %s138 = smul.addr %s134, 1024
        %s139 = sadd.s32 %s137, %s138
        %s140 = smul.addr %s139, 4
        %s141 = scalar_lea.vmem %s0, %s140
        %s142 = smul.u32 128, %s15
      $region24: #{pallas_grouped_matmul.1} parent=19 // pred_fallthru
        _
    $region20: #{pallas_grouped_matmul.1} parent=5 // pred_fallthru
      _
    %p143 = scmp.le.s32.totalorder 1, %s8
    %p144 = scmp.lt.s32.totalorder %s8, 5
    %p145 = pnand %p143, %p144
    %p146 = pneg %p145
    // Predicated region
    $region25: #{pallas_grouped_matmul.1} parent=5 // pred_check
      _
    $region26: #{pallas_grouped_matmul.1} parent=5 // pred_check_branch
      %148 = sbr.rel (%p145) target = $region28
    $region27: #{pallas_grouped_matmul.1} parent=5 // pred_region
      %s149 = ssub.s32 %s8, 1
      %s150 = smul.u32 128, %s17
      %p151 = scmp.lt.s32.totalorder %s18, 0
      %s152 = scalar_select %p151, %s18, 0
      %p153 = scmp.lt.s32.totalorder %s150, 511
      %s154 = scalar_select %p153, %s150, 511
      %s155 = smul.addr %s154, 2
      %s156 = smul.addr %s152, 1024
      %s157 = sadd.s32 %s155, %s156
      %s158 = smul.addr %s157, 4
      %s159 = scalar_lea.vmem %s0, %s158
      %p160 = pneg %p48
      %p161 = pneg %p45
      %p162 = scmp.lt.s32.totalorder %s18, 0
      %s163 = scalar_select %p162, %s18, 0
      %s164 = smul.addr %s163, 29
      %s165 = smul.addr %s164, 4
      %s166 = scalar_lea.vmem %s1, %s165
      %p167 = pneg %p74
      %p168 = pneg %p71
      %p169 = pneg %p102
      %p170 = pneg %p99
      %s171 = smul.u32 128, %s17
      %p172 = scmp.lt.s32.totalorder %s18, 0
      %s173 = scalar_select %p172, %s18, 0
      %p174 = scmp.lt.s32.totalorder %s171, 511
      %s175 = scalar_select %p174, %s171, 511
      %s176 = smul.addr %s173, 512
      %s177 = sadd.s32 %s175, %s176
      %s178 = smul.addr %s177, 4
      %s179 = scalar_lea.vmem %s2, %s178
      %s180 = smul.u32 128, %s17
      %p181 = scmp.lt.s32.totalorder %s18, 0
      %s182 = scalar_select %p181, %s18, 0
      %p183 = scmp.lt.s32.totalorder %s180, 511
      %s184 = scalar_select %p183, %s180, 511
      %s185 = smul.addr %s184, 2
      %s186 = smul.addr %s182, 1024
      %s187 = sadd.s32 %s185, %s186
      %s188 = smul.addr %s187, 4
      %s189 = scalar_lea.vmem %s0, %s188
      %s190 = smul.u32 128, %s17
      %p191 = scmp.lt.s32.totalorder %s18, 0
      %s192 = scalar_select %p191, %s18, 0
      %s193 = smul.addr %s192, 29
      %s194 = smul.addr %s193, 4
      %s195 = scalar_lea.vmem %s1, %s194
      %s196 = smul.u32 128, %s17
      %p197 = scmp.lt.s32.totalorder %s18, 0
      %s198 = scalar_select %p197, %s18, 0
      %p199 = scmp.lt.s32.totalorder %s196, 511
      %s200 = scalar_select %p199, %s196, 511
      %s201 = smul.addr %s198, 512
      %s202 = sadd.s32 %s200, %s201
      %s203 = smul.addr %s202, 4
      %s204 = scalar_lea.vmem %s2, %s203
      %s205 = smul.u32 128, %s17
      %v207 = vld [vmem:[%s189] sm:$0xff]
      %v208 = vld [vmem:[%s189 + $0x8] sm:$0xff]
      %v209 = vld [vmem:[%s189 + $0x10] sm:$0xff]
      %v210 = vld [vmem:[%s189 + $0x18] sm:$0xff]
      %v211 = vld [vmem:[%s189 + $0x20] sm:$0xff]
      %v212 = vld [vmem:[%s189 + $0x28] sm:$0xff]
      %v213 = vld [vmem:[%s189 + $0x30] sm:$0xff]
      %v214 = vld [vmem:[%s189 + $0x38] sm:$0xff]
      %v215 = vld [vmem:[%s189 + $0x40] sm:$0xff]
      %v216 = vld [vmem:[%s189 + $0x48] sm:$0xff]
      %v217 = vld [vmem:[%s189 + $0x50] sm:$0xff]
      %v218 = vld [vmem:[%s189 + $0x58] sm:$0xff]
      %v219 = vld [vmem:[%s189 + $0x60] sm:$0xff]
      %v220 = vld [vmem:[%s189 + $0x68] sm:$0xff]
      %v221 = vld [vmem:[%s189 + $0x70] sm:$0xff]
      %v222 = vld [vmem:[%s189 + $0x78] sm:$0xff]
      %v223 = vld [vmem:[%s189 + $0x80] sm:$0xff]
      %v224 = vld [vmem:[%s189 + $0x88] sm:$0xff]
      %v225 = vld [vmem:[%s189 + $0x90] sm:$0xff]
      %v226 = vld [vmem:[%s189 + $0x98] sm:$0xff]
      %v227 = vld [vmem:[%s189 + $0xa0] sm:$0xff]
      %v228 = vld [vmem:[%s189 + $0xa8] sm:$0xff]
      %v229 = vld [vmem:[%s189 + $0xb0] sm:$0xff]
      %v230 = vld [vmem:[%s189 + $0xb8] sm:$0xff]
      %v231 = vld [vmem:[%s189 + $0xc0] sm:$0xff]
      %v232 = vld [vmem:[%s189 + $0xc8] sm:$0xff]
      %v233 = vld [vmem:[%s189 + $0xd0] sm:$0xff]
      %v234 = vld [vmem:[%s189 + $0xd8] sm:$0xff]
      %v235 = vld [vmem:[%s189 + $0xe0] sm:$0xff]
      %v236 = vld [vmem:[%s189 + $0xe8] sm:$0xff]
      %v237 = vld [vmem:[%s189 + $0xf0] sm:$0xff]
      %v238 = vld [vmem:[%s189 + $0xf8] sm:$0xff]
      %v239 = vld [vmem:[%s189 + $0x100] sm:$0xff]
      %v240 = vld [vmem:[%s189 + $0x108] sm:$0xff]
      %v241 = vld [vmem:[%s189 + $0x110] sm:$0xff]
      %v242 = vld [vmem:[%s189 + $0x118] sm:$0xff]
      %v243 = vld [vmem:[%s189 + $0x120] sm:$0xff]
      %v244 = vld [vmem:[%s189 + $0x128] sm:$0xff]
      %v245 = vld [vmem:[%s189 + $0x130] sm:$0xff]
      %v246 = vld [vmem:[%s189 + $0x138] sm:$0xff]
      %v247 = vld [vmem:[%s189 + $0x140] sm:$0xff]
      %v248 = vld [vmem:[%s189 + $0x148] sm:$0xff]
      %v249 = vld [vmem:[%s189 + $0x150] sm:$0xff]
      %v250 = vld [vmem:[%s189 + $0x158] sm:$0xff]
      %v251 = vld [vmem:[%s189 + $0x160] sm:$0xff]
      %v252 = vld [vmem:[%s189 + $0x168] sm:$0xff]
      %v253 = vld [vmem:[%s189 + $0x170] sm:$0xff]
      %v254 = vld [vmem:[%s189 + $0x178] sm:$0xff]
      %v255 = vld [vmem:[%s189 + $0x180] sm:$0xff]
      %v256 = vld [vmem:[%s189 + $0x188] sm:$0xff]
      %v257 = vld [vmem:[%s189 + $0x190] sm:$0xff]
      %v258 = vld [vmem:[%s189 + $0x198] sm:$0xff]
      %v259 = vld [vmem:[%s189 + $0x1a0] sm:$0xff]
      %v260 = vld [vmem:[%s189 + $0x1a8] sm:$0xff]
      %v261 = vld [vmem:[%s189 + $0x1b0] sm:$0xff]
      %v262 = vld [vmem:[%s189 + $0x1b8] sm:$0xff]
      %v263 = vld [vmem:[%s189 + $0x1c0] sm:$0xff]
      %v264 = vld [vmem:[%s189 + $0x1c8] sm:$0xff]
      %v265 = vld [vmem:[%s189 + $0x1d0] sm:$0xff]
      %v266 = vld [vmem:[%s189 + $0x1d8] sm:$0xff]
      %v267 = vld [vmem:[%s189 + $0x1e0] sm:$0xff]
      %v268 = vld [vmem:[%s189 + $0x1e8] sm:$0xff]
      %v269 = vld [vmem:[%s189 + $0x1f0] sm:$0xff]
      %v270 = vld [vmem:[%s189 + $0x1f8] sm:$0xff]
      %v271 = vld [vmem:[%s189 + $0x200] sm:$0xff]
      %v272 = vld [vmem:[%s189 + $0x208] sm:$0xff]
      %v273 = vld [vmem:[%s189 + $0x210] sm:$0xff]
      %v274 = vld [vmem:[%s189 + $0x218] sm:$0xff]
      %v275 = vld [vmem:[%s189 + $0x220] sm:$0xff]
      %v276 = vld [vmem:[%s189 + $0x228] sm:$0xff]
      %v277 = vld [vmem:[%s189 + $0x230] sm:$0xff]
      %v278 = vld [vmem:[%s189 + $0x238] sm:$0xff]
      %v279 = vld [vmem:[%s189 + $0x240] sm:$0xff]
      %v280 = vld [vmem:[%s189 + $0x248] sm:$0xff]
      %v281 = vld [vmem:[%s189 + $0x250] sm:$0xff]
      %v282 = vld [vmem:[%s189 + $0x258] sm:$0xff]
      %v283 = vld [vmem:[%s189 + $0x260] sm:$0xff]
      %v284 = vld [vmem:[%s189 + $0x268] sm:$0xff]
      %v285 = vld [vmem:[%s189 + $0x270] sm:$0xff]
      %v286 = vld [vmem:[%s189 + $0x278] sm:$0xff]
      %v287 = vld [vmem:[%s189 + $0x280] sm:$0xff]
      %v288 = vld [vmem:[%s189 + $0x288] sm:$0xff]
      %v289 = vld [vmem:[%s189 + $0x290] sm:$0xff]
      %v290 = vld [vmem:[%s189 + $0x298] sm:$0xff]
      %v291 = vld [vmem:[%s189 + $0x2a0] sm:$0xff]
      %v292 = vld [vmem:[%s189 + $0x2a8] sm:$0xff]
      %v293 = vld [vmem:[%s189 + $0x2b0] sm:$0xff]
      %v294 = vld [vmem:[%s189 + $0x2b8] sm:$0xff]
      %v295 = vld [vmem:[%s189 + $0x2c0] sm:$0xff]
      %v296 = vld [vmem:[%s189 + $0x2c8] sm:$0xff]
      %v297 = vld [vmem:[%s189 + $0x2d0] sm:$0xff]
      %v298 = vld [vmem:[%s189 + $0x2d8] sm:$0xff]
      %v299 = vld [vmem:[%s189 + $0x2e0] sm:$0xff]
      %v300 = vld [vmem:[%s189 + $0x2e8] sm:$0xff]
      %v301 = vld [vmem:[%s189 + $0x2f0] sm:$0xff]
      %v302 = vld [vmem:[%s189 + $0x2f8] sm:$0xff]
      %v303 = vld [vmem:[%s189 + $0x300] sm:$0xff]
      %v304 = vld [vmem:[%s189 + $0x308] sm:$0xff]
      %v305 = vld [vmem:[%s189 + $0x310] sm:$0xff]
      %v306 = vld [vmem:[%s189 + $0x318] sm:$0xff]
      %v307 = vld [vmem:[%s189 + $0x320] sm:$0xff]
      %v308 = vld [vmem:[%s189 + $0x328] sm:$0xff]
      %v309 = vld [vmem:[%s189 + $0x330] sm:$0xff]
      %v310 = vld [vmem:[%s189 + $0x338] sm:$0xff]
      %v311 = vld [vmem:[%s189 + $0x340] sm:$0xff]
      %v312 = vld [vmem:[%s189 + $0x348] sm:$0xff]
      %v313 = vld [vmem:[%s189 + $0x350] sm:$0xff]
      %v314 = vld [vmem:[%s189 + $0x358] sm:$0xff]
      %v315 = vld [vmem:[%s189 + $0x360] sm:$0xff]
      %v316 = vld [vmem:[%s189 + $0x368] sm:$0xff]
      %v317 = vld [vmem:[%s189 + $0x370] sm:$0xff]
      %v318 = vld [vmem:[%s189 + $0x378] sm:$0xff]
      %v319 = vld [vmem:[%s189 + $0x380] sm:$0xff]
      %v320 = vld [vmem:[%s189 + $0x388] sm:$0xff]
      %v321 = vld [vmem:[%s189 + $0x390] sm:$0xff]
      %v322 = vld [vmem:[%s189 + $0x398] sm:$0xff]
      %v323 = vld [vmem:[%s189 + $0x3a0] sm:$0xff]
      %v324 = vld [vmem:[%s189 + $0x3a8] sm:$0xff]
      %v325 = vld [vmem:[%s189 + $0x3b0] sm:$0xff]
      %v326 = vld [vmem:[%s189 + $0x3b8] sm:$0xff]
      %v327 = vld [vmem:[%s189 + $0x3c0] sm:$0xff]
      %v328 = vld [vmem:[%s189 + $0x3c8] sm:$0xff]
      %v329 = vld [vmem:[%s189 + $0x3d0] sm:$0xff]
      %v330 = vld [vmem:[%s189 + $0x3d8] sm:$0xff]
      %v331 = vld [vmem:[%s189 + $0x3e0] sm:$0xff]
      %v332 = vld [vmem:[%s189 + $0x3e8] sm:$0xff]
      %v333 = vld [vmem:[%s189 + $0x3f0] sm:$0xff]
      %v334 = vld [vmem:[%s189 + $0x3f8] sm:$0xff]
      %v335 = vld [vmem:[%s195] sm:$0xf]
      %v336 = vld [vmem:[%s195 + $0x4] sm:$0xf]
      %v337 = vld [vmem:[%s195 + $0x8] sm:$0xf]
      %v338 = vld [vmem:[%s195 + $0xc] sm:$0xf]
      %v339 = vld [vmem:[%s195 + $0x10] sm:$0xf]
      %v340 = vld [vmem:[%s195 + $0x14] sm:$0xf]
      %v341 = vld [vmem:[%s195 + $0x18] sm:$0xf]
      %v342 = vld [vmem:[%s195 + $0x1c] sm:$0xf]
      %v343 = vld [vmem:[%s195 + $0x20] sm:$0xf]
      %v344 = vld [vmem:[%s195 + $0x24] sm:$0xf]
      %v345 = vld [vmem:[%s195 + $0x28] sm:$0xf]
      %v346 = vld [vmem:[%s195 + $0x2c] sm:$0xf]
      %v347 = vld [vmem:[%s195 + $0x30] sm:$0xf]
      %v348 = vld [vmem:[%s195 + $0x34] sm:$0xf]
      %v349 = vld [vmem:[%s195 + $0x38] sm:$0xf]
      %v350 = vld [vmem:[%s195 + $0x3c] sm:$0xf]
      %v351 = vld [vmem:[%s195 + $0x40] sm:$0xf]
      %v352 = vld [vmem:[%s195 + $0x44] sm:$0xf]
      %v353 = vld [vmem:[%s195 + $0x48] sm:$0xf]
      %v354 = vld [vmem:[%s195 + $0x4c] sm:$0xf]
      %v355 = vld [vmem:[%s195 + $0x50] sm:$0xf]
      %v356 = vld [vmem:[%s195 + $0x54] sm:$0xf]
      %v357 = vld [vmem:[%s195 + $0x58] sm:$0xf]
      %v358 = vld [vmem:[%s195 + $0x5c] sm:$0xf]
      %v359 = vld [vmem:[%s195 + $0x60] sm:$0xf]
      %v360 = vld [vmem:[%s195 + $0x64] sm:$0xf]
      %v361 = vld [vmem:[%s195 + $0x68] sm:$0xf]
      %v362 = vld [vmem:[%s195 + $0x6c] sm:$0xf]
      %v363 = vld [vmem:[%s195 + $0x70] sm:$0x1]
      %v492 = vunpack.c.l.b16 %v207
      %v493 = vunpack.c.h.b16 %v207
      %v494 = vunpack.c.l.b16 %v208
      %v495 = vunpack.c.h.b16 %v208
      %v496 = vunpack.c.l.b16 %v209
      %v497 = vunpack.c.h.b16 %v209
      %v498 = vunpack.c.l.b16 %v210
      %v499 = vunpack.c.h.b16 %v210
      %v500 = vunpack.c.l.b16 %v211
      %v501 = vunpack.c.h.b16 %v211
      %v502 = vunpack.c.l.b16 %v212
      %v503 = vunpack.c.h.b16 %v212
      %v504 = vunpack.c.l.b16 %v213
      %v505 = vunpack.c.h.b16 %v213
      %v506 = vunpack.c.l.b16 %v214
      %v507 = vunpack.c.h.b16 %v214
      %v508 = vunpack.c.l.b16 %v215
      %v509 = vunpack.c.h.b16 %v215
      %v510 = vunpack.c.l.b16 %v216
      %v511 = vunpack.c.h.b16 %v216
      %v512 = vunpack.c.l.b16 %v217
      %v513 = vunpack.c.h.b16 %v217
      %v514 = vunpack.c.l.b16 %v218
      %v515 = vunpack.c.h.b16 %v218
      %v516 = vunpack.c.l.b16 %v219
      %v517 = vunpack.c.h.b16 %v219
      %v518 = vunpack.c.l.b16 %v220
      %v519 = vunpack.c.h.b16 %v220
      %v520 = vunpack.c.l.b16 %v221
      %v521 = vunpack.c.h.b16 %v221
      %v522 = vunpack.c.l.b16 %v222
      %v523 = vunpack.c.h.b16 %v222
      %v524 = vunpack.c.l.b16 %v223
      %v525 = vunpack.c.h.b16 %v223
      %v526 = vunpack.c.l.b16 %v224
      %v527 = vunpack.c.h.b16 %v224
      %v528 = vunpack.c.l.b16 %v225
      %v529 = vunpack.c.h.b16 %v225
      %v530 = vunpack.c.l.b16 %v226
      %v531 = vunpack.c.h.b16 %v226
      %v532 = vunpack.c.l.b16 %v227
      %v533 = vunpack.c.h.b16 %v227
      %v534 = vunpack.c.l.b16 %v228
      %v535 = vunpack.c.h.b16 %v228
      %v536 = vunpack.c.l.b16 %v229
      %v537 = vunpack.c.h.b16 %v229
      %v538 = vunpack.c.l.b16 %v230
      %v539 = vunpack.c.h.b16 %v230
      %v540 = vunpack.c.l.b16 %v231
      %v541 = vunpack.c.h.b16 %v231
      %v542 = vunpack.c.l.b16 %v232
      %v543 = vunpack.c.h.b16 %v232
      %v544 = vunpack.c.l.b16 %v233
      %v545 = vunpack.c.h.b16 %v233
      %v546 = vunpack.c.l.b16 %v234
      %v547 = vunpack.c.h.b16 %v234
      %v548 = vunpack.c.l.b16 %v235
      %v549 = vunpack.c.h.b16 %v235
      %v550 = vunpack.c.l.b16 %v236
      %v551 = vunpack.c.h.b16 %v236
      %v552 = vunpack.c.l.b16 %v237
      %v553 = vunpack.c.h.b16 %v237
      %v554 = vunpack.c.l.b16 %v238
      %v555 = vunpack.c.h.b16 %v238
      %v556 = vunpack.c.l.b16 %v239
      %v557 = vunpack.c.h.b16 %v239
      %v558 = vunpack.c.l.b16 %v240
      %v559 = vunpack.c.h.b16 %v240
      %v560 = vunpack.c.l.b16 %v241
      %v561 = vunpack.c.h.b16 %v241
      %v562 = vunpack.c.l.b16 %v242
      %v563 = vunpack.c.h.b16 %v242
      %v564 = vunpack.c.l.b16 %v243
      %v565 = vunpack.c.h.b16 %v243
      %v566 = vunpack.c.l.b16 %v244
      %v567 = vunpack.c.h.b16 %v244
      %v568 = vunpack.c.l.b16 %v245
      %v569 = vunpack.c.h.b16 %v245
      %v570 = vunpack.c.l.b16 %v246
      %v571 = vunpack.c.h.b16 %v246
      %v572 = vunpack.c.l.b16 %v247
      %v573 = vunpack.c.h.b16 %v247
      %v574 = vunpack.c.l.b16 %v248
      %v575 = vunpack.c.h.b16 %v248
      %v576 = vunpack.c.l.b16 %v249
      %v577 = vunpack.c.h.b16 %v249
      %v578 = vunpack.c.l.b16 %v250
      %v579 = vunpack.c.h.b16 %v250
      %v580 = vunpack.c.l.b16 %v251
      %v581 = vunpack.c.h.b16 %v251
      %v582 = vunpack.c.l.b16 %v252
      %v583 = vunpack.c.h.b16 %v252
      %v584 = vunpack.c.l.b16 %v253
      %v585 = vunpack.c.h.b16 %v253
      %v586 = vunpack.c.l.b16 %v254
      %v587 = vunpack.c.h.b16 %v254
      %v588 = vunpack.c.l.b16 %v255
      %v589 = vunpack.c.h.b16 %v255
      %v590 = vunpack.c.l.b16 %v256
      %v591 = vunpack.c.h.b16 %v256
      %v592 = vunpack.c.l.b16 %v257
      %v593 = vunpack.c.h.b16 %v257
      %v594 = vunpack.c.l.b16 %v258
      %v595 = vunpack.c.h.b16 %v258
      %v596 = vunpack.c.l.b16 %v259
      %v597 = vunpack.c.h.b16 %v259
      %v598 = vunpack.c.l.b16 %v260
      %v599 = vunpack.c.h.b16 %v260
      %v600 = vunpack.c.l.b16 %v261
      %v601 = vunpack.c.h.b16 %v261
      %v602 = vunpack.c.l.b16 %v262
      %v603 = vunpack.c.h.b16 %v262
      %v604 = vunpack.c.l.b16 %v263
      %v605 = vunpack.c.h.b16 %v263
      %v606 = vunpack.c.l.b16 %v264
      %v607 = vunpack.c.h.b16 %v264
      %v608 = vunpack.c.l.b16 %v265
      %v609 = vunpack.c.h.b16 %v265
      %v610 = vunpack.c.l.b16 %v266
      %v611 = vunpack.c.h.b16 %v266
      %v612 = vunpack.c.l.b16 %v267
      %v613 = vunpack.c.h.b16 %v267
      %v614 = vunpack.c.l.b16 %v268
      %v615 = vunpack.c.h.b16 %v268
      %v616 = vunpack.c.l.b16 %v269
      %v617 = vunpack.c.h.b16 %v269
      %v618 = vunpack.c.l.b16 %v270
      %v619 = vunpack.c.h.b16 %v270
      %v620 = vunpack.c.l.b16 %v271
      %v621 = vunpack.c.h.b16 %v271
      %v622 = vunpack.c.l.b16 %v272
      %v623 = vunpack.c.h.b16 %v272
      %v624 = vunpack.c.l.b16 %v273
      %v625 = vunpack.c.h.b16 %v273
      %v626 = vunpack.c.l.b16 %v274
      %v627 = vunpack.c.h.b16 %v274
      %v628 = vunpack.c.l.b16 %v275
      %v629 = vunpack.c.h.b16 %v275
      %v630 = vunpack.c.l.b16 %v276
      %v631 = vunpack.c.h.b16 %v276
      %v632 = vunpack.c.l.b16 %v277
      %v633 = vunpack.c.h.b16 %v277
      %v634 = vunpack.c.l.b16 %v278
      %v635 = vunpack.c.h.b16 %v278
      %v636 = vunpack.c.l.b16 %v279
      %v637 = vunpack.c.h.b16 %v279
      %v638 = vunpack.c.l.b16 %v280
      %v639 = vunpack.c.h.b16 %v280
      %v640 = vunpack.c.l.b16 %v281
      %v641 = vunpack.c.h.b16 %v281
      %v642 = vunpack.c.l.b16 %v282
      %v643 = vunpack.c.h.b16 %v282
      %v644 = vunpack.c.l.b16 %v283
      %v645 = vunpack.c.h.b16 %v283
      %v646 = vunpack.c.l.b16 %v284
      %v647 = vunpack.c.h.b16 %v284
      %v648 = vunpack.c.l.b16 %v285
      %v649 = vunpack.c.h.b16 %v285
      %v650 = vunpack.c.l.b16 %v286
      %v651 = vunpack.c.h.b16 %v286
      %v652 = vunpack.c.l.b16 %v287
      %v653 = vunpack.c.h.b16 %v287
      %v654 = vunpack.c.l.b16 %v288
      %v655 = vunpack.c.h.b16 %v288
      %v656 = vunpack.c.l.b16 %v289
      %v657 = vunpack.c.h.b16 %v289
      %v658 = vunpack.c.l.b16 %v290
      %v659 = vunpack.c.h.b16 %v290
      %v660 = vunpack.c.l.b16 %v291
      %v661 = vunpack.c.h.b16 %v291
      %v662 = vunpack.c.l.b16 %v292
      %v663 = vunpack.c.h.b16 %v292
      %v664 = vunpack.c.l.b16 %v293
      %v665 = vunpack.c.h.b16 %v293
      %v666 = vunpack.c.l.b16 %v294
      %v667 = vunpack.c.h.b16 %v294
      %v668 = vunpack.c.l.b16 %v295
      %v669 = vunpack.c.h.b16 %v295
      %v670 = vunpack.c.l.b16 %v296
      %v671 = vunpack.c.h.b16 %v296
      %v672 = vunpack.c.l.b16 %v297
      %v673 = vunpack.c.h.b16 %v297
      %v674 = vunpack.c.l.b16 %v298
      %v675 = vunpack.c.h.b16 %v298
      %v676 = vunpack.c.l.b16 %v299
      %v677 = vunpack.c.h.b16 %v299
      %v678 = vunpack.c.l.b16 %v300
      %v679 = vunpack.c.h.b16 %v300
      %v680 = vunpack.c.l.b16 %v301
      %v681 = vunpack.c.h.b16 %v301
      %v682 = vunpack.c.l.b16 %v302
      %v683 = vunpack.c.h.b16 %v302
      %v684 = vunpack.c.l.b16 %v303
      %v685 = vunpack.c.h.b16 %v303
      %v686 = vunpack.c.l.b16 %v304
      %v687 = vunpack.c.h.b16 %v304
      %v688 = vunpack.c.l.b16 %v305
      %v689 = vunpack.c.h.b16 %v305
      %v690 = vunpack.c.l.b16 %v306
      %v691 = vunpack.c.h.b16 %v306
      %v692 = vunpack.c.l.b16 %v307
      %v693 = vunpack.c.h.b16 %v307
      %v694 = vunpack.c.l.b16 %v308
      %v695 = vunpack.c.h.b16 %v308
      %v696 = vunpack.c.l.b16 %v309
      %v697 = vunpack.c.h.b16 %v309
      %v698 = vunpack.c.l.b16 %v310
      %v699 = vunpack.c.h.b16 %v310
      %v700 = vunpack.c.l.b16 %v311
      %v701 = vunpack.c.h.b16 %v311
      %v702 = vunpack.c.l.b16 %v312
      %v703 = vunpack.c.h.b16 %v312
      %v704 = vunpack.c.l.b16 %v313
      %v705 = vunpack.c.h.b16 %v313
      %v706 = vunpack.c.l.b16 %v314
      %v707 = vunpack.c.h.b16 %v314
      %v708 = vunpack.c.l.b16 %v315
      %v709 = vunpack.c.h.b16 %v315
      %v710 = vunpack.c.l.b16 %v316
      %v711 = vunpack.c.h.b16 %v316
      %v712 = vunpack.c.l.b16 %v317
      %v713 = vunpack.c.h.b16 %v317
      %v714 = vunpack.c.l.b16 %v318
      %v715 = vunpack.c.h.b16 %v318
      %v716 = vunpack.c.l.b16 %v319
      %v717 = vunpack.c.h.b16 %v319
      %v718 = vunpack.c.l.b16 %v320
      %v719 = vunpack.c.h.b16 %v320
      %v720 = vunpack.c.l.b16 %v321
      %v721 = vunpack.c.h.b16 %v321
      %v722 = vunpack.c.l.b16 %v322
      %v723 = vunpack.c.h.b16 %v322
      %v724 = vunpack.c.l.b16 %v323
      %v725 = vunpack.c.h.b16 %v323
      %v726 = vunpack.c.l.b16 %v324
      %v727 = vunpack.c.h.b16 %v324
      %v728 = vunpack.c.l.b16 %v325
      %v729 = vunpack.c.h.b16 %v325
      %v730 = vunpack.c.l.b16 %v326
      %v731 = vunpack.c.h.b16 %v326
      %v732 = vunpack.c.l.b16 %v327
      %v733 = vunpack.c.h.b16 %v327
      %v734 = vunpack.c.l.b16 %v328
      %v735 = vunpack.c.h.b16 %v328
      %v736 = vunpack.c.l.b16 %v329
      %v737 = vunpack.c.h.b16 %v329
      %v738 = vunpack.c.l.b16 %v330
      %v739 = vunpack.c.h.b16 %v330
      %v740 = vunpack.c.l.b16 %v331
      %v741 = vunpack.c.h.b16 %v331
      %v742 = vunpack.c.l.b16 %v332
      %v743 = vunpack.c.h.b16 %v332
      %v744 = vunpack.c.l.b16 %v333
      %v745 = vunpack.c.h.b16 %v333
      %v746 = vunpack.c.l.b16 %v334
      %v747 = vunpack.c.h.b16 %v334
      %v748 = vpack.c.b16 %v494, %v492
      %v749 = vpack.c.b16 %v495, %v493
      %v750 = vpack.c.b16 %v498, %v496
      %v751 = vpack.c.b16 %v499, %v497
      %v752 = vpack.c.b16 %v502, %v500
      %v753 = vpack.c.b16 %v503, %v501
      %v754 = vpack.c.b16 %v506, %v504
      %v755 = vpack.c.b16 %v507, %v505
      %v756 = vpack.c.b16 %v510, %v508
      %v757 = vpack.c.b16 %v511, %v509
      %v758 = vpack.c.b16 %v514, %v512
      %v759 = vpack.c.b16 %v515, %v513
      %v760 = vpack.c.b16 %v518, %v516
      %v761 = vpack.c.b16 %v519, %v517
      %v762 = vpack.c.b16 %v522, %v520
      %v763 = vpack.c.b16 %v523, %v521
      %v764 = vpack.c.b16 %v526, %v524
      %v765 = vpack.c.b16 %v527, %v525
      %v766 = vpack.c.b16 %v530, %v528
      %v767 = vpack.c.b16 %v531, %v529
      %v768 = vpack.c.b16 %v534, %v532
      %v769 = vpack.c.b16 %v535, %v533
      %v770 = vpack.c.b16 %v538, %v536
      %v771 = vpack.c.b16 %v539, %v537
      %v772 = vpack.c.b16 %v542, %v540
      %v773 = vpack.c.b16 %v543, %v541
      %v774 = vpack.c.b16 %v546, %v544
      %v775 = vpack.c.b16 %v547, %v545
      %v776 = vpack.c.b16 %v550, %v548
      %v777 = vpack.c.b16 %v551, %v549
      %v778 = vpack.c.b16 %v554, %v552
      %v779 = vpack.c.b16 %v555, %v553
      %v780 = vpack.c.b16 %v558, %v556
      %v781 = vpack.c.b16 %v559, %v557
      %v782 = vpack.c.b16 %v562, %v560
      %v783 = vpack.c.b16 %v563, %v561
      %v784 = vpack.c.b16 %v566, %v564
      %v785 = vpack.c.b16 %v567, %v565
      %v786 = vpack.c.b16 %v570, %v568
      %v787 = vpack.c.b16 %v571, %v569
      %v788 = vpack.c.b16 %v574, %v572
      %v789 = vpack.c.b16 %v575, %v573
      %v790 = vpack.c.b16 %v578, %v576
      %v791 = vpack.c.b16 %v579, %v577
      %v792 = vpack.c.b16 %v582, %v580
      %v793 = vpack.c.b16 %v583, %v581
      %v794 = vpack.c.b16 %v586, %v584
      %v795 = vpack.c.b16 %v587, %v585
      %v796 = vpack.c.b16 %v590, %v588
      %v797 = vpack.c.b16 %v591, %v589
      %v798 = vpack.c.b16 %v594, %v592
      %v799 = vpack.c.b16 %v595, %v593
      %v800 = vpack.c.b16 %v598, %v596
      %v801 = vpack.c.b16 %v599, %v597
      %v802 = vpack.c.b16 %v602, %v600
      %v803 = vpack.c.b16 %v603, %v601
      %v804 = vpack.c.b16 %v606, %v604
      %v805 = vpack.c.b16 %v607, %v605
      %v806 = vpack.c.b16 %v610, %v608
      %v807 = vpack.c.b16 %v611, %v609
      %v808 = vpack.c.b16 %v614, %v612
      %v809 = vpack.c.b16 %v615, %v613
      %v810 = vpack.c.b16 %v618, %v616
      %v811 = vpack.c.b16 %v619, %v617
      %v812 = vpack.c.b16 %v622, %v620
      %v813 = vpack.c.b16 %v623, %v621
      %v814 = vpack.c.b16 %v626, %v624
      %v815 = vpack.c.b16 %v627, %v625
      %v816 = vpack.c.b16 %v630, %v628
      %v817 = vpack.c.b16 %v631, %v629
      %v818 = vpack.c.b16 %v634, %v632
      %v819 = vpack.c.b16 %v635, %v633
      %v820 = vpack.c.b16 %v638, %v636
      %v821 = vpack.c.b16 %v639, %v637
      %v822 = vpack.c.b16 %v642, %v640
      %v823 = vpack.c.b16 %v643, %v641
      %v824 = vpack.c.b16 %v646, %v644
      %v825 = vpack.c.b16 %v647, %v645
      %v826 = vpack.c.b16 %v650, %v648
      %v827 = vpack.c.b16 %v651, %v649
      %v828 = vpack.c.b16 %v654, %v652
      %v829 = vpack.c.b16 %v655, %v653
      %v830 = vpack.c.b16 %v658, %v656
      %v831 = vpack.c.b16 %v659, %v657
      %v832 = vpack.c.b16 %v662, %v660
      %v833 = vpack.c.b16 %v663, %v661
      %v834 = vpack.c.b16 %v666, %v664
      %v835 = vpack.c.b16 %v667, %v665
      %v836 = vpack.c.b16 %v670, %v668
      %v837 = vpack.c.b16 %v671, %v669
      %v838 = vpack.c.b16 %v674, %v672
      %v839 = vpack.c.b16 %v675, %v673
      %v840 = vpack.c.b16 %v678, %v676
      %v841 = vpack.c.b16 %v679, %v677
      %v842 = vpack.c.b16 %v682, %v680
      %v843 = vpack.c.b16 %v683, %v681
      %v844 = vpack.c.b16 %v686, %v684
      %v845 = vpack.c.b16 %v687, %v685
      %v846 = vpack.c.b16 %v690, %v688
      %v847 = vpack.c.b16 %v691, %v689
      %v848 = vpack.c.b16 %v694, %v692
      %v849 = vpack.c.b16 %v695, %v693
      %v850 = vpack.c.b16 %v698, %v696
      %v851 = vpack.c.b16 %v699, %v697
      %v852 = vpack.c.b16 %v702, %v700
      %v853 = vpack.c.b16 %v703, %v701
      %v854 = vpack.c.b16 %v706, %v704
      %v855 = vpack.c.b16 %v707, %v705
      %v856 = vpack.c.b16 %v710, %v708
      %v857 = vpack.c.b16 %v711, %v709
      %v858 = vpack.c.b16 %v714, %v712
      %v859 = vpack.c.b16 %v715, %v713
      %v860 = vpack.c.b16 %v718, %v716
      %v861 = vpack.c.b16 %v719, %v717
      %v862 = vpack.c.b16 %v722, %v720
      %v863 = vpack.c.b16 %v723, %v721
      %v864 = vpack.c.b16 %v726, %v724
      %v865 = vpack.c.b16 %v727, %v725
      %v866 = vpack.c.b16 %v730, %v728
      %v867 = vpack.c.b16 %v731, %v729
      %v868 = vpack.c.b16 %v734, %v732
      %v869 = vpack.c.b16 %v735, %v733
      %v870 = vpack.c.b16 %v738, %v736
      %v871 = vpack.c.b16 %v739, %v737
      %v872 = vpack.c.b16 %v742, %v740
      %v873 = vpack.c.b16 %v743, %v741
      %v874 = vpack.c.b16 %v746, %v744
      %v875 = vpack.c.b16 %v747, %v745
      %v969 = vunpack.c.l.b16 %v335
      %v970 = vunpack.c.l.b16 %v336
      %v971 = vunpack.c.l.b16 %v337
      %v972 = vunpack.c.l.b16 %v338
      %v973 = vunpack.c.l.b16 %v339
      %v974 = vunpack.c.l.b16 %v340
      %v975 = vunpack.c.l.b16 %v341
      %v976 = vunpack.c.l.b16 %v342
      %v977 = vunpack.c.l.b16 %v343
      %v978 = vunpack.c.l.b16 %v344
      %v979 = vunpack.c.l.b16 %v345
      %v980 = vunpack.c.l.b16 %v346
      %v981 = vunpack.c.l.b16 %v347
      %v982 = vunpack.c.l.b16 %v348
      %v983 = vunpack.c.l.b16 %v349
      %v984 = vunpack.c.l.b16 %v350
      %v985 = vunpack.c.l.b16 %v351
      %v986 = vunpack.c.l.b16 %v352
      %v987 = vunpack.c.l.b16 %v353
      %v988 = vunpack.c.l.b16 %v354
      %v989 = vunpack.c.l.b16 %v355
      %v990 = vunpack.c.l.b16 %v356
      %v991 = vunpack.c.l.b16 %v357
      %v992 = vunpack.c.l.b16 %v358
      %v993 = vunpack.c.l.b16 %v359
      %v994 = vunpack.c.l.b16 %v360
      %v995 = vunpack.c.l.b16 %v361
      %v996 = vunpack.c.l.b16 %v362
      %v997 = vunpack.c.l.b16 %v363
      %v998 = vpack.c.b16 %v970, %v969
      %v999 = vpack.c.b16 %v972, %v971
      %v1000 = vpack.c.b16 %v974, %v973
      %v1001 = vpack.c.b16 %v976, %v975
      %v1002 = vpack.c.b16 %v978, %v977
      %v1003 = vpack.c.b16 %v980, %v979
      %v1004 = vpack.c.b16 %v982, %v981
      %v1005 = vpack.c.b16 %v984, %v983
      %v1006 = vpack.c.b16 %v986, %v985
      %v1007 = vpack.c.b16 %v988, %v987
      %v1008 = vpack.c.b16 %v990, %v989
      %v1009 = vpack.c.b16 %v992, %v991
      %v1010 = vpack.c.b16 %v994, %v993
      %v1011 = vpack.c.b16 %v996, %v995
      %v1012 = vpack.c.b16 %v997, %v997
      %vm1027 = vcmask 793600
      %v1029 = vsel %vm1027, %v749, 0
      %v1032 = vsel %vm1027, %v751, 0
      %v1035 = vsel %vm1027, %v753, 0
      %v1038 = vsel %vm1027, %v755, 0
      %v1041 = vsel %vm1027, %v757, 0
      %v1044 = vsel %vm1027, %v759, 0
      %v1047 = vsel %vm1027, %v761, 0
      %v1050 = vsel %vm1027, %v763, 0
      %v1053 = vsel %vm1027, %v765, 0
      %v1056 = vsel %vm1027, %v767, 0
      %v1059 = vsel %vm1027, %v769, 0
      %v1062 = vsel %vm1027, %v771, 0
      %v1065 = vsel %vm1027, %v773, 0
      %v1068 = vsel %vm1027, %v775, 0
      %v1071 = vsel %vm1027, %v777, 0
      %v1074 = vsel %vm1027, %v779, 0
      %v1077 = vsel %vm1027, %v781, 0
      %v1080 = vsel %vm1027, %v783, 0
      %v1083 = vsel %vm1027, %v785, 0
      %v1086 = vsel %vm1027, %v787, 0
      %v1089 = vsel %vm1027, %v789, 0
      %v1092 = vsel %vm1027, %v791, 0
      %v1095 = vsel %vm1027, %v793, 0
      %v1098 = vsel %vm1027, %v795, 0
      %v1101 = vsel %vm1027, %v797, 0
      %v1104 = vsel %vm1027, %v799, 0
      %v1107 = vsel %vm1027, %v801, 0
      %v1110 = vsel %vm1027, %v803, 0
      %v1113 = vsel %vm1027, %v805, 0
      %v1116 = vsel %vm1027, %v807, 0
      %v1119 = vsel %vm1027, %v809, 0
      %v1122 = vsel %vm1027, %v811, 0
      %v1125 = vsel %vm1027, %v813, 0
      %v1128 = vsel %vm1027, %v815, 0
      %v1131 = vsel %vm1027, %v817, 0
      %v1134 = vsel %vm1027, %v819, 0
      %v1137 = vsel %vm1027, %v821, 0
      %v1140 = vsel %vm1027, %v823, 0
      %v1143 = vsel %vm1027, %v825, 0
      %v1146 = vsel %vm1027, %v827, 0
      %v1149 = vsel %vm1027, %v829, 0
      %v1152 = vsel %vm1027, %v831, 0
      %v1155 = vsel %vm1027, %v833, 0
      %v1158 = vsel %vm1027, %v835, 0
      %v1161 = vsel %vm1027, %v837, 0
      %v1164 = vsel %vm1027, %v839, 0
      %v1167 = vsel %vm1027, %v841, 0
      %v1170 = vsel %vm1027, %v843, 0
      %v1173 = vsel %vm1027, %v845, 0
      %v1176 = vsel %vm1027, %v847, 0
      %v1179 = vsel %vm1027, %v849, 0
      %v1182 = vsel %vm1027, %v851, 0
      %v1185 = vsel %vm1027, %v853, 0
      %v1188 = vsel %vm1027, %v855, 0
      %v1191 = vsel %vm1027, %v857, 0
      %v1194 = vsel %vm1027, %v859, 0
      %v1197 = vsel %vm1027, %v861, 0
      %v1200 = vsel %vm1027, %v863, 0
      %v1203 = vsel %vm1027, %v865, 0
      %v1206 = vsel %vm1027, %v867, 0
      %v1209 = vsel %vm1027, %v869, 0
      %v1212 = vsel %vm1027, %v871, 0
      %v1215 = vsel %vm1027, %v873, 0
      %v1218 = vsel %vm1027, %v875, 0
      %vm1220 = vcmask 1040384
      %v1221 = vsel 0, 4294967295, 65535
      %v1222 = vsel %vm1220, %v1221, 0
      %v1224 = vand.u32 %v1012, %v1222
      %1226 = vmatpush.bf16.msra.mxu0 %v1005
      %1227 = vmatpush.bf16.msra.mxu0 %v1004
      %1228 = vmatpush.bf16.msra.mxu0 %v1003
      %1229 = vmatpush.bf16.msra.mxu0 %v1002
      %1230 = vmatpush.bf16.msra.mxu0 %v1001
      %1231 = vmatpush.bf16.msra.mxu0 %v1000
      %1232 = vmatpush.bf16.msra.mxu0 %v999
      %1233 = vmatpush.bf16.msra.mxu0 %v998
      %1234 = vmatmul.bf16.gmra.mxu0 %v748
      %v1235 = vpop.f32.mrf.mxu0
      %v1236 = vadd.f32 0.0, %v1235
      %v1237 = vpop.f32.mrf.mxu0
      %v1238 = vadd.f32 0.0, %v1237
      %1239 = vmatmul.bf16.gmra.mxu0 %v750
      %v1240 = vpop.f32.mrf.mxu0
      %v1241 = vadd.f32 0.0, %v1240
      %v1242 = vpop.f32.mrf.mxu0
      %v1243 = vadd.f32 0.0, %v1242
      %1244 = vmatmul.bf16.gmra.mxu0 %v752
      %v1245 = vpop.f32.mrf.mxu0
      %v1246 = vadd.f32 0.0, %v1245
      %v1247 = vpop.f32.mrf.mxu0
      %v1248 = vadd.f32 0.0, %v1247
      %1249 = vmatmul.bf16.gmra.mxu0 %v754
      %v1250 = vpop.f32.mrf.mxu0
      %v1251 = vadd.f32 0.0, %v1250
      %v1252 = vpop.f32.mrf.mxu0
      %v1253 = vadd.f32 0.0, %v1252
      %1254 = vmatmul.bf16.gmra.mxu0 %v756
      %v1255 = vpop.f32.mrf.mxu0
      %v1256 = vadd.f32 0.0, %v1255
      %v1257 = vpop.f32.mrf.mxu0
      %v1258 = vadd.f32 0.0, %v1257
      %1259 = vmatmul.bf16.gmra.mxu0 %v758
      %v1260 = vpop.f32.mrf.mxu0
      %v1261 = vadd.f32 0.0, %v1260
      %v1262 = vpop.f32.mrf.mxu0
      %v1263 = vadd.f32 0.0, %v1262
      %1264 = vmatmul.bf16.gmra.mxu0 %v760
      %v1265 = vpop.f32.mrf.mxu0
      %v1266 = vadd.f32 0.0, %v1265
      %v1267 = vpop.f32.mrf.mxu0
      %v1268 = vadd.f32 0.0, %v1267
      %1269 = vmatmul.bf16.gmra.mxu0 %v762
      %v1270 = vpop.f32.mrf.mxu0
      %v1271 = vadd.f32 0.0, %v1270
      %v1272 = vpop.f32.mrf.mxu0
      %v1273 = vadd.f32 0.0, %v1272
      %1274 = vmatmul.bf16.gmra.mxu0 %v764
      %v1275 = vpop.f32.mrf.mxu0
      %v1276 = vadd.f32 0.0, %v1275
      %v1277 = vpop.f32.mrf.mxu0
      %v1278 = vadd.f32 0.0, %v1277
      %1279 = vmatmul.bf16.gmra.mxu0 %v766
      %v1280 = vpop.f32.mrf.mxu0
      %v1281 = vadd.f32 0.0, %v1280
      %v1282 = vpop.f32.mrf.mxu0
      %v1283 = vadd.f32 0.0, %v1282
      %1284 = vmatmul.bf16.gmra.mxu0 %v768
      %v1285 = vpop.f32.mrf.mxu0
      %v1286 = vadd.f32 0.0, %v1285
      %v1287 = vpop.f32.mrf.mxu0
      %v1288 = vadd.f32 0.0, %v1287
      %1289 = vmatmul.bf16.gmra.mxu0 %v770
      %v1290 = vpop.f32.mrf.mxu0
      %v1291 = vadd.f32 0.0, %v1290
      %v1292 = vpop.f32.mrf.mxu0
      %v1293 = vadd.f32 0.0, %v1292
      %1294 = vmatmul.bf16.gmra.mxu0 %v772
      %v1295 = vpop.f32.mrf.mxu0
      %v1296 = vadd.f32 0.0, %v1295
      %v1297 = vpop.f32.mrf.mxu0
      %v1298 = vadd.f32 0.0, %v1297
      %1299 = vmatmul.bf16.gmra.mxu0 %v774
      %v1300 = vpop.f32.mrf.mxu0
      %v1301 = vadd.f32 0.0, %v1300
      %v1302 = vpop.f32.mrf.mxu0
      %v1303 = vadd.f32 0.0, %v1302
      %1304 = vmatmul.bf16.gmra.mxu0 %v776
      %v1305 = vpop.f32.mrf.mxu0
      %v1306 = vadd.f32 0.0, %v1305
      %v1307 = vpop.f32.mrf.mxu0
      %v1308 = vadd.f32 0.0, %v1307
      %1309 = vmatmul.bf16.gmra.mxu0 %v778
      %v1310 = vpop.f32.mrf.mxu0
      %v1311 = vadd.f32 0.0, %v1310
      %v1312 = vpop.f32.mrf.mxu0
      %v1313 = vadd.f32 0.0, %v1312
      %1314 = vmatmul.bf16.gmra.mxu0 %v780
      %v1315 = vpop.f32.mrf.mxu0
      %v1316 = vadd.f32 0.0, %v1315
      %v1317 = vpop.f32.mrf.mxu0
      %v1318 = vadd.f32 0.0, %v1317
      %1319 = vmatmul.bf16.gmra.mxu0 %v782
      %v1320 = vpop.f32.mrf.mxu0
      %v1321 = vadd.f32 0.0, %v1320
      %v1322 = vpop.f32.mrf.mxu0
      %v1323 = vadd.f32 0.0, %v1322
      %1324 = vmatmul.bf16.gmra.mxu0 %v784
      %v1325 = vpop.f32.mrf.mxu0
      %v1326 = vadd.f32 0.0, %v1325
      %v1327 = vpop.f32.mrf.mxu0
      %v1328 = vadd.f32 0.0, %v1327
      %1329 = vmatmul.bf16.gmra.mxu0 %v786
      %v1330 = vpop.f32.mrf.mxu0
      %v1331 = vadd.f32 0.0, %v1330
      %v1332 = vpop.f32.mrf.mxu0
      %v1333 = vadd.f32 0.0, %v1332
      %1334 = vmatmul.bf16.gmra.mxu0 %v788
      %v1335 = vpop.f32.mrf.mxu0
      %v1336 = vadd.f32 0.0, %v1335
      %v1337 = vpop.f32.mrf.mxu0
      %v1338 = vadd.f32 0.0, %v1337
      %1339 = vmatmul.bf16.gmra.mxu0 %v790
      %v1340 = vpop.f32.mrf.mxu0
      %v1341 = vadd.f32 0.0, %v1340
      %v1342 = vpop.f32.mrf.mxu0
      %v1343 = vadd.f32 0.0, %v1342
      %1344 = vmatmul.bf16.gmra.mxu0 %v792
      %v1345 = vpop.f32.mrf.mxu0
      %v1346 = vadd.f32 0.0, %v1345
      %v1347 = vpop.f32.mrf.mxu0
      %v1348 = vadd.f32 0.0, %v1347
      %1349 = vmatmul.bf16.gmra.mxu0 %v794
      %v1350 = vpop.f32.mrf.mxu0
      %v1351 = vadd.f32 0.0, %v1350
      %v1352 = vpop.f32.mrf.mxu0
      %v1353 = vadd.f32 0.0, %v1352
      %1354 = vmatmul.bf16.gmra.mxu0 %v796
      %v1355 = vpop.f32.mrf.mxu0
      %v1356 = vadd.f32 0.0, %v1355
      %v1357 = vpop.f32.mrf.mxu0
      %v1358 = vadd.f32 0.0, %v1357
      %1359 = vmatmul.bf16.gmra.mxu0 %v798
      %v1360 = vpop.f32.mrf.mxu0
      %v1361 = vadd.f32 0.0, %v1360
      %v1362 = vpop.f32.mrf.mxu0
      %v1363 = vadd.f32 0.0, %v1362
      %1364 = vmatmul.bf16.gmra.mxu0 %v800
      %v1365 = vpop.f32.mrf.mxu0
      %v1366 = vadd.f32 0.0, %v1365
      %v1367 = vpop.f32.mrf.mxu0
      %v1368 = vadd.f32 0.0, %v1367
      %1369 = vmatmul.bf16.gmra.mxu0 %v802
      %v1370 = vpop.f32.mrf.mxu0
      %v1371 = vadd.f32 0.0, %v1370
      %v1372 = vpop.f32.mrf.mxu0
      %v1373 = vadd.f32 0.0, %v1372
      %1374 = vmatmul.bf16.gmra.mxu0 %v804
      %v1375 = vpop.f32.mrf.mxu0
      %v1376 = vadd.f32 0.0, %v1375
      %v1377 = vpop.f32.mrf.mxu0
      %v1378 = vadd.f32 0.0, %v1377
      %1379 = vmatmul.bf16.gmra.mxu0 %v806
      %v1380 = vpop.f32.mrf.mxu0
      %v1381 = vadd.f32 0.0, %v1380
      %v1382 = vpop.f32.mrf.mxu0
      %v1383 = vadd.f32 0.0, %v1382
      %1384 = vmatmul.bf16.gmra.mxu0 %v808
      %v1385 = vpop.f32.mrf.mxu0
      %v1386 = vadd.f32 0.0, %v1385
      %v1387 = vpop.f32.mrf.mxu0
      %v1388 = vadd.f32 0.0, %v1387
      %1389 = vmatmul.bf16.gmra.mxu0 %v810
      %v1390 = vpop.f32.mrf.mxu0
      %v1391 = vadd.f32 0.0, %v1390
      %v1392 = vpop.f32.mrf.mxu0
      %v1393 = vadd.f32 0.0, %v1392
      %1394 = vmatmul.bf16.gmra.mxu0 %v812
      %v1395 = vpop.f32.mrf.mxu0
      %v1396 = vadd.f32 0.0, %v1395
      %v1397 = vpop.f32.mrf.mxu0
      %v1398 = vadd.f32 0.0, %v1397
      %1399 = vmatmul.bf16.gmra.mxu0 %v814
      %v1400 = vpop.f32.mrf.mxu0
      %v1401 = vadd.f32 0.0, %v1400
      %v1402 = vpop.f32.mrf.mxu0
      %v1403 = vadd.f32 0.0, %v1402
      %1404 = vmatmul.bf16.gmra.mxu0 %v816
      %v1405 = vpop.f32.mrf.mxu0
      %v1406 = vadd.f32 0.0, %v1405
      %v1407 = vpop.f32.mrf.mxu0
      %v1408 = vadd.f32 0.0, %v1407
      %1409 = vmatmul.bf16.gmra.mxu0 %v818
      %v1410 = vpop.f32.mrf.mxu0
      %v1411 = vadd.f32 0.0, %v1410
      %v1412 = vpop.f32.mrf.mxu0
      %v1413 = vadd.f32 0.0, %v1412
      %1414 = vmatmul.bf16.gmra.mxu0 %v820
      %v1415 = vpop.f32.mrf.mxu0
      %v1416 = vadd.f32 0.0, %v1415
      %v1417 = vpop.f32.mrf.mxu0
      %v1418 = vadd.f32 0.0, %v1417
      %1419 = vmatmul.bf16.gmra.mxu0 %v822
      %v1420 = vpop.f32.mrf.mxu0
      %v1421 = vadd.f32 0.0, %v1420
      %v1422 = vpop.f32.mrf.mxu0
      %v1423 = vadd.f32 0.0, %v1422
      %1424 = vmatmul.bf16.gmra.mxu0 %v824
      %v1425 = vpop.f32.mrf.mxu0
      %v1426 = vadd.f32 0.0, %v1425
      %v1427 = vpop.f32.mrf.mxu0
      %v1428 = vadd.f32 0.0, %v1427
      %1429 = vmatmul.bf16.gmra.mxu0 %v826
      %v1430 = vpop.f32.mrf.mxu0
      %v1431 = vadd.f32 0.0, %v1430
      %v1432 = vpop.f32.mrf.mxu0
      %v1433 = vadd.f32 0.0, %v1432
      %1434 = vmatmul.bf16.gmra.mxu0 %v828
      %v1435 = vpop.f32.mrf.mxu0
      %v1436 = vadd.f32 0.0, %v1435
      %v1437 = vpop.f32.mrf.mxu0
      %v1438 = vadd.f32 0.0, %v1437
      %1439 = vmatmul.bf16.gmra.mxu0 %v830
      %v1440 = vpop.f32.mrf.mxu0
      %v1441 = vadd.f32 0.0, %v1440
      %v1442 = vpop.f32.mrf.mxu0
      %v1443 = vadd.f32 0.0, %v1442
      %1444 = vmatmul.bf16.gmra.mxu0 %v832
      %v1445 = vpop.f32.mrf.mxu0
      %v1446 = vadd.f32 0.0, %v1445
      %v1447 = vpop.f32.mrf.mxu0
      %v1448 = vadd.f32 0.0, %v1447
      %1449 = vmatmul.bf16.gmra.mxu0 %v834
      %v1450 = vpop.f32.mrf.mxu0
      %v1451 = vadd.f32 0.0, %v1450
      %v1452 = vpop.f32.mrf.mxu0
      %v1453 = vadd.f32 0.0, %v1452
      %1454 = vmatmul.bf16.gmra.mxu0 %v836
      %v1455 = vpop.f32.mrf.mxu0
      %v1456 = vadd.f32 0.0, %v1455
      %v1457 = vpop.f32.mrf.mxu0
      %v1458 = vadd.f32 0.0, %v1457
      %1459 = vmatmul.bf16.gmra.mxu0 %v838
      %v1460 = vpop.f32.mrf.mxu0
      %v1461 = vadd.f32 0.0, %v1460
      %v1462 = vpop.f32.mrf.mxu0
      %v1463 = vadd.f32 0.0, %v1462
      %1464 = vmatmul.bf16.gmra.mxu0 %v840
      %v1465 = vpop.f32.mrf.mxu0
      %v1466 = vadd.f32 0.0, %v1465
      %v1467 = vpop.f32.mrf.mxu0
      %v1468 = vadd.f32 0.0, %v1467
      %1469 = vmatmul.bf16.gmra.mxu0 %v842
      %v1470 = vpop.f32.mrf.mxu0
      %v1471 = vadd.f32 0.0, %v1470
      %v1472 = vpop.f32.mrf.mxu0
      %v1473 = vadd.f32 0.0, %v1472
      %1474 = vmatmul.bf16.gmra.mxu0 %v844
      %v1475 = vpop.f32.mrf.mxu0
      %v1476 = vadd.f32 0.0, %v1475
      %v1477 = vpop.f32.mrf.mxu0
      %v1478 = vadd.f32 0.0, %v1477
      %1479 = vmatmul.bf16.gmra.mxu0 %v846
      %v1480 = vpop.f32.mrf.mxu0
      %v1481 = vadd.f32 0.0, %v1480
      %v1482 = vpop.f32.mrf.mxu0
      %v1483 = vadd.f32 0.0, %v1482
      %1484 = vmatmul.bf16.gmra.mxu0 %v848
      %v1485 = vpop.f32.mrf.mxu0
      %v1486 = vadd.f32 0.0, %v1485
      %v1487 = vpop.f32.mrf.mxu0
      %v1488 = vadd.f32 0.0, %v1487
      %1489 = vmatmul.bf16.gmra.mxu0 %v850
      %v1490 = vpop.f32.mrf.mxu0
      %v1491 = vadd.f32 0.0, %v1490
      %v1492 = vpop.f32.mrf.mxu0
      %v1493 = vadd.f32 0.0, %v1492
      %1494 = vmatmul.bf16.gmra.mxu0 %v852
      %v1495 = vpop.f32.mrf.mxu0
      %v1496 = vadd.f32 0.0, %v1495
      %v1497 = vpop.f32.mrf.mxu0
      %v1498 = vadd.f32 0.0, %v1497
      %1499 = vmatmul.bf16.gmra.mxu0 %v854
      %v1500 = vpop.f32.mrf.mxu0
      %v1501 = vadd.f32 0.0, %v1500
      %v1502 = vpop.f32.mrf.mxu0
      %v1503 = vadd.f32 0.0, %v1502
      %1504 = vmatmul.bf16.gmra.mxu0 %v856
      %v1505 = vpop.f32.mrf.mxu0
      %v1506 = vadd.f32 0.0, %v1505
      %v1507 = vpop.f32.mrf.mxu0
      %v1508 = vadd.f32 0.0, %v1507
      %1509 = vmatmul.bf16.gmra.mxu0 %v858
      %v1510 = vpop.f32.mrf.mxu0
      %v1511 = vadd.f32 0.0, %v1510
      %v1512 = vpop.f32.mrf.mxu0
      %v1513 = vadd.f32 0.0, %v1512
      %1514 = vmatmul.bf16.gmra.mxu0 %v860
      %v1515 = vpop.f32.mrf.mxu0
      %v1516 = vadd.f32 0.0, %v1515
      %v1517 = vpop.f32.mrf.mxu0
      %v1518 = vadd.f32 0.0, %v1517
      %1519 = vmatmul.bf16.gmra.mxu0 %v862
      %v1520 = vpop.f32.mrf.mxu0
      %v1521 = vadd.f32 0.0, %v1520
      %v1522 = vpop.f32.mrf.mxu0
      %v1523 = vadd.f32 0.0, %v1522
      %1524 = vmatmul.bf16.gmra.mxu0 %v864
      %v1525 = vpop.f32.mrf.mxu0
      %v1526 = vadd.f32 0.0, %v1525
      %v1527 = vpop.f32.mrf.mxu0
      %v1528 = vadd.f32 0.0, %v1527
      %1529 = vmatmul.bf16.gmra.mxu0 %v866
      %v1530 = vpop.f32.mrf.mxu0
      %v1531 = vadd.f32 0.0, %v1530
      %v1532 = vpop.f32.mrf.mxu0
      %v1533 = vadd.f32 0.0, %v1532
      %1534 = vmatmul.bf16.gmra.mxu0 %v868
      %v1535 = vpop.f32.mrf.mxu0
      %v1536 = vadd.f32 0.0, %v1535
      %v1537 = vpop.f32.mrf.mxu0
      %v1538 = vadd.f32 0.0, %v1537
      %1539 = vmatmul.bf16.gmra.mxu0 %v870
      %v1540 = vpop.f32.mrf.mxu0
      %v1541 = vadd.f32 0.0, %v1540
      %v1542 = vpop.f32.mrf.mxu0
      %v1543 = vadd.f32 0.0, %v1542
      %1544 = vmatmul.bf16.gmra.mxu0 %v872
      %v1545 = vpop.f32.mrf.mxu0
      %v1546 = vadd.f32 0.0, %v1545
      %v1547 = vpop.f32.mrf.mxu0
      %v1548 = vadd.f32 0.0, %v1547
      %1549 = vmatmul.bf16.gmra.mxu0 %v874
      %v1550 = vpop.f32.mrf.mxu0
      %v1551 = vadd.f32 0.0, %v1550
      %v1552 = vpop.f32.mrf.mxu0
      %v1553 = vadd.f32 0.0, %v1552
      %1554 = vdwg.mxu0
      %1555 = vmatpush.bf16.msra.mxu0 0
      %1556 = vmatpush.bf16.msra.mxu0 %v1224
      %1557 = vmatpush.bf16.msra.mxu0 %v1011
      %1558 = vmatpush.bf16.msra.mxu0 %v1010
      %1559 = vmatpush.bf16.msra.mxu0 %v1009
      %1560 = vmatpush.bf16.msra.mxu0 %v1008
      %1561 = vmatpush.bf16.msra.mxu0 %v1007
      %1562 = vmatpush.bf16.msra.mxu0 %v1006
      %1563 = vmatmul.bf16.gmra.mxu0 %v1029
      %v1564 = vpop.f32.mrf.mxu0
      %v1565 = vadd.f32 %v1236, %v1564
      %v1566 = vpop.f32.mrf.mxu0
      %v1567 = vadd.f32 %v1238, %v1566
      %1568 = vmatmul.bf16.gmra.mxu0 %v1032
      %v1569 = vpop.f32.mrf.mxu0
      %v1570 = vadd.f32 %v1241, %v1569
      %v1571 = vpop.f32.mrf.mxu0
      %v1572 = vadd.f32 %v1243, %v1571
      %1573 = vmatmul.bf16.gmra.mxu0 %v1035
      %v1574 = vpop.f32.mrf.mxu0
      %v1575 = vadd.f32 %v1246, %v1574
      %v1576 = vpop.f32.mrf.mxu0
      %v1577 = vadd.f32 %v1248, %v1576
      %1578 = vmatmul.bf16.gmra.mxu0 %v1038
      %v1579 = vpop.f32.mrf.mxu0
      %v1580 = vadd.f32 %v1251, %v1579
      %v1581 = vpop.f32.mrf.mxu0
      %v1582 = vadd.f32 %v1253, %v1581
      %1583 = vmatmul.bf16.gmra.mxu0 %v1041
      %v1584 = vpop.f32.mrf.mxu0
      %v1585 = vadd.f32 %v1256, %v1584
      %v1586 = vpop.f32.mrf.mxu0
      %v1587 = vadd.f32 %v1258, %v1586
      %1588 = vmatmul.bf16.gmra.mxu0 %v1044
      %v1589 = vpop.f32.mrf.mxu0
      %v1590 = vadd.f32 %v1261, %v1589
      %v1591 = vpop.f32.mrf.mxu0
      %v1592 = vadd.f32 %v1263, %v1591
      %1593 = vmatmul.bf16.gmra.mxu0 %v1047
      %v1594 = vpop.f32.mrf.mxu0
      %v1595 = vadd.f32 %v1266, %v1594
      %v1596 = vpop.f32.mrf.mxu0
      %v1597 = vadd.f32 %v1268, %v1596
      %1598 = vmatmul.bf16.gmra.mxu0 %v1050
      %v1599 = vpop.f32.mrf.mxu0
      %v1600 = vadd.f32 %v1271, %v1599
      %v1601 = vpop.f32.mrf.mxu0
      %v1602 = vadd.f32 %v1273, %v1601
      %1603 = vmatmul.bf16.gmra.mxu0 %v1053
      %v1604 = vpop.f32.mrf.mxu0
      %v1605 = vadd.f32 %v1276, %v1604
      %v1606 = vpop.f32.mrf.mxu0
      %v1607 = vadd.f32 %v1278, %v1606
      %1608 = vmatmul.bf16.gmra.mxu0 %v1056
      %v1609 = vpop.f32.mrf.mxu0
      %v1610 = vadd.f32 %v1281, %v1609
      %v1611 = vpop.f32.mrf.mxu0
      %v1612 = vadd.f32 %v1283, %v1611
      %1613 = vmatmul.bf16.gmra.mxu0 %v1059
      %v1614 = vpop.f32.mrf.mxu0
      %v1615 = vadd.f32 %v1286, %v1614
      %v1616 = vpop.f32.mrf.mxu0
      %v1617 = vadd.f32 %v1288, %v1616
      %1618 = vmatmul.bf16.gmra.mxu0 %v1062
      %v1619 = vpop.f32.mrf.mxu0
      %v1620 = vadd.f32 %v1291, %v1619
      %v1621 = vpop.f32.mrf.mxu0
      %v1622 = vadd.f32 %v1293, %v1621
      %1623 = vmatmul.bf16.gmra.mxu0 %v1065
      %v1624 = vpop.f32.mrf.mxu0
      %v1625 = vadd.f32 %v1296, %v1624
      %v1626 = vpop.f32.mrf.mxu0
      %v1627 = vadd.f32 %v1298, %v1626
      %1628 = vmatmul.bf16.gmra.mxu0 %v1068
      %v1629 = vpop.f32.mrf.mxu0
      %v1630 = vadd.f32 %v1301, %v1629
      %v1631 = vpop.f32.mrf.mxu0
      %v1632 = vadd.f32 %v1303, %v1631
      %1633 = vmatmul.bf16.gmra.mxu0 %v1071
      %v1634 = vpop.f32.mrf.mxu0
      %v1635 = vadd.f32 %v1306, %v1634
      %v1636 = vpop.f32.mrf.mxu0
      %v1637 = vadd.f32 %v1308, %v1636
      %1638 = vmatmul.bf16.gmra.mxu0 %v1074
      %v1639 = vpop.f32.mrf.mxu0
      %v1640 = vadd.f32 %v1311, %v1639
      %v1641 = vpop.f32.mrf.mxu0
      %v1642 = vadd.f32 %v1313, %v1641
      %1643 = vmatmul.bf16.gmra.mxu0 %v1077
      %v1644 = vpop.f32.mrf.mxu0
      %v1645 = vadd.f32 %v1316, %v1644
      %v1646 = vpop.f32.mrf.mxu0
      %v1647 = vadd.f32 %v1318, %v1646
      %1648 = vmatmul.bf16.gmra.mxu0 %v1080
      %v1649 = vpop.f32.mrf.mxu0
      %v1650 = vadd.f32 %v1321, %v1649
      %v1651 = vpop.f32.mrf.mxu0
      %v1652 = vadd.f32 %v1323, %v1651
      %1653 = vmatmul.bf16.gmra.mxu0 %v1083
      %v1654 = vpop.f32.mrf.mxu0
      %v1655 = vadd.f32 %v1326, %v1654
      %v1656 = vpop.f32.mrf.mxu0
      %v1657 = vadd.f32 %v1328, %v1656
      %1658 = vmatmul.bf16.gmra.mxu0 %v1086
      %v1659 = vpop.f32.mrf.mxu0
      %v1660 = vadd.f32 %v1331, %v1659
      %v1661 = vpop.f32.mrf.mxu0
      %v1662 = vadd.f32 %v1333, %v1661
      %1663 = vmatmul.bf16.gmra.mxu0 %v1089
      %v1664 = vpop.f32.mrf.mxu0
      %v1665 = vadd.f32 %v1336, %v1664
      %v1666 = vpop.f32.mrf.mxu0
      %v1667 = vadd.f32 %v1338, %v1666
      %1668 = vmatmul.bf16.gmra.mxu0 %v1092
      %v1669 = vpop.f32.mrf.mxu0
      %v1670 = vadd.f32 %v1341, %v1669
      %v1671 = vpop.f32.mrf.mxu0
      %v1672 = vadd.f32 %v1343, %v1671
      %1673 = vmatmul.bf16.gmra.mxu0 %v1095
      %v1674 = vpop.f32.mrf.mxu0
      %v1675 = vadd.f32 %v1346, %v1674
      %v1676 = vpop.f32.mrf.mxu0
      %v1677 = vadd.f32 %v1348, %v1676
      %1678 = vmatmul.bf16.gmra.mxu0 %v1098
      %v1679 = vpop.f32.mrf.mxu0
      %v1680 = vadd.f32 %v1351, %v1679
      %v1681 = vpop.f32.mrf.mxu0
      %v1682 = vadd.f32 %v1353, %v1681
      %1683 = vmatmul.bf16.gmra.mxu0 %v1101
      %v1684 = vpop.f32.mrf.mxu0
      %v1685 = vadd.f32 %v1356, %v1684
      %v1686 = vpop.f32.mrf.mxu0
      %v1687 = vadd.f32 %v1358, %v1686
      %1688 = vmatmul.bf16.gmra.mxu0 %v1104
      %v1689 = vpop.f32.mrf.mxu0
      %v1690 = vadd.f32 %v1361, %v1689
      %v1691 = vpop.f32.mrf.mxu0
      %v1692 = vadd.f32 %v1363, %v1691
      %1693 = vmatmul.bf16.gmra.mxu0 %v1107
      %v1694 = vpop.f32.mrf.mxu0
      %v1695 = vadd.f32 %v1366, %v1694
      %v1696 = vpop.f32.mrf.mxu0
      %v1697 = vadd.f32 %v1368, %v1696
      %1698 = vmatmul.bf16.gmra.mxu0 %v1110
      %v1699 = vpop.f32.mrf.mxu0
      %v1700 = vadd.f32 %v1371, %v1699
      %v1701 = vpop.f32.mrf.mxu0
      %v1702 = vadd.f32 %v1373, %v1701
      %1703 = vmatmul.bf16.gmra.mxu0 %v1113
      %v1704 = vpop.f32.mrf.mxu0
      %v1705 = vadd.f32 %v1376, %v1704
      %v1706 = vpop.f32.mrf.mxu0
      %v1707 = vadd.f32 %v1378, %v1706
      %1708 = vmatmul.bf16.gmra.mxu0 %v1116
      %v1709 = vpop.f32.mrf.mxu0
      %v1710 = vadd.f32 %v1381, %v1709
      %v1711 = vpop.f32.mrf.mxu0
      %v1712 = vadd.f32 %v1383, %v1711
      %1713 = vmatmul.bf16.gmra.mxu0 %v1119
      %v1714 = vpop.f32.mrf.mxu0
      %v1715 = vadd.f32 %v1386, %v1714
      %v1716 = vpop.f32.mrf.mxu0
      %v1717 = vadd.f32 %v1388, %v1716
      %1718 = vmatmul.bf16.gmra.mxu0 %v1122
      %v1719 = vpop.f32.mrf.mxu0
      %v1720 = vadd.f32 %v1391, %v1719
      %v1721 = vpop.f32.mrf.mxu0
      %v1722 = vadd.f32 %v1393, %v1721
      %1723 = vmatmul.bf16.gmra.mxu0 %v1125
      %v1724 = vpop.f32.mrf.mxu0
      %v1725 = vadd.f32 %v1396, %v1724
      %v1726 = vpop.f32.mrf.mxu0
      %v1727 = vadd.f32 %v1398, %v1726
      %1728 = vmatmul.bf16.gmra.mxu0 %v1128
      %v1729 = vpop.f32.mrf.mxu0
      %v1730 = vadd.f32 %v1401, %v1729
      %v1731 = vpop.f32.mrf.mxu0
      %v1732 = vadd.f32 %v1403, %v1731
      %1733 = vmatmul.bf16.gmra.mxu0 %v1131
      %v1734 = vpop.f32.mrf.mxu0
      %v1735 = vadd.f32 %v1406, %v1734
      %v1736 = vpop.f32.mrf.mxu0
      %v1737 = vadd.f32 %v1408, %v1736
      %1738 = vmatmul.bf16.gmra.mxu0 %v1134
      %v1739 = vpop.f32.mrf.mxu0
      %v1740 = vadd.f32 %v1411, %v1739
      %v1741 = vpop.f32.mrf.mxu0
      %v1742 = vadd.f32 %v1413, %v1741
      %1743 = vmatmul.bf16.gmra.mxu0 %v1137
      %v1744 = vpop.f32.mrf.mxu0
      %v1745 = vadd.f32 %v1416, %v1744
      %v1746 = vpop.f32.mrf.mxu0
      %v1747 = vadd.f32 %v1418, %v1746
      %1748 = vmatmul.bf16.gmra.mxu0 %v1140
      %v1749 = vpop.f32.mrf.mxu0
      %v1750 = vadd.f32 %v1421, %v1749
      %v1751 = vpop.f32.mrf.mxu0
      %v1752 = vadd.f32 %v1423, %v1751
      %1753 = vmatmul.bf16.gmra.mxu0 %v1143
      %v1754 = vpop.f32.mrf.mxu0
      %v1755 = vadd.f32 %v1426, %v1754
      %v1756 = vpop.f32.mrf.mxu0
      %v1757 = vadd.f32 %v1428, %v1756
      %1758 = vmatmul.bf16.gmra.mxu0 %v1146
      %v1759 = vpop.f32.mrf.mxu0
      %v1760 = vadd.f32 %v1431, %v1759
      %v1761 = vpop.f32.mrf.mxu0
      %v1762 = vadd.f32 %v1433, %v1761
      %1763 = vmatmul.bf16.gmra.mxu0 %v1149
      %v1764 = vpop.f32.mrf.mxu0
      %v1765 = vadd.f32 %v1436, %v1764
      %v1766 = vpop.f32.mrf.mxu0
      %v1767 = vadd.f32 %v1438, %v1766
      %1768 = vmatmul.bf16.gmra.mxu0 %v1152
      %v1769 = vpop.f32.mrf.mxu0
      %v1770 = vadd.f32 %v1441, %v1769
      %v1771 = vpop.f32.mrf.mxu0
      %v1772 = vadd.f32 %v1443, %v1771
      %1773 = vmatmul.bf16.gmra.mxu0 %v1155
      %v1774 = vpop.f32.mrf.mxu0
      %v1775 = vadd.f32 %v1446, %v1774
      %v1776 = vpop.f32.mrf.mxu0
      %v1777 = vadd.f32 %v1448, %v1776
      %1778 = vmatmul.bf16.gmra.mxu0 %v1158
      %v1779 = vpop.f32.mrf.mxu0
      %v1780 = vadd.f32 %v1451, %v1779
      %v1781 = vpop.f32.mrf.mxu0
      %v1782 = vadd.f32 %v1453, %v1781
      %1783 = vmatmul.bf16.gmra.mxu0 %v1161
      %v1784 = vpop.f32.mrf.mxu0
      %v1785 = vadd.f32 %v1456, %v1784
      %v1786 = vpop.f32.mrf.mxu0
      %v1787 = vadd.f32 %v1458, %v1786
      %1788 = vmatmul.bf16.gmra.mxu0 %v1164
      %v1789 = vpop.f32.mrf.mxu0
      %v1790 = vadd.f32 %v1461, %v1789
      %v1791 = vpop.f32.mrf.mxu0
      %v1792 = vadd.f32 %v1463, %v1791
      %1793 = vmatmul.bf16.gmra.mxu0 %v1167
      %v1794 = vpop.f32.mrf.mxu0
      %v1795 = vadd.f32 %v1466, %v1794
      %v1796 = vpop.f32.mrf.mxu0
      %v1797 = vadd.f32 %v1468, %v1796
      %1798 = vmatmul.bf16.gmra.mxu0 %v1170
      %v1799 = vpop.f32.mrf.mxu0
      %v1800 = vadd.f32 %v1471, %v1799
      %v1801 = vpop.f32.mrf.mxu0
      %v1802 = vadd.f32 %v1473, %v1801
      %1803 = vmatmul.bf16.gmra.mxu0 %v1173
      %v1804 = vpop.f32.mrf.mxu0
      %v1805 = vadd.f32 %v1476, %v1804
      %v1806 = vpop.f32.mrf.mxu0
      %v1807 = vadd.f32 %v1478, %v1806
      %1808 = vmatmul.bf16.gmra.mxu0 %v1176
      %v1809 = vpop.f32.mrf.mxu0
      %v1810 = vadd.f32 %v1481, %v1809
      %v1811 = vpop.f32.mrf.mxu0
      %v1812 = vadd.f32 %v1483, %v1811
      %1813 = vmatmul.bf16.gmra.mxu0 %v1179
      %v1814 = vpop.f32.mrf.mxu0
      %v1815 = vadd.f32 %v1486, %v1814
      %v1816 = vpop.f32.mrf.mxu0
      %v1817 = vadd.f32 %v1488, %v1816
      %1818 = vmatmul.bf16.gmra.mxu0 %v1182
      %v1819 = vpop.f32.mrf.mxu0
      %v1820 = vadd.f32 %v1491, %v1819
      %v1821 = vpop.f32.mrf.mxu0
      %v1822 = vadd.f32 %v1493, %v1821
      %1823 = vmatmul.bf16.gmra.mxu0 %v1185
      %v1824 = vpop.f32.mrf.mxu0
      %v1825 = vadd.f32 %v1496, %v1824
      %v1826 = vpop.f32.mrf.mxu0
      %v1827 = vadd.f32 %v1498, %v1826
      %1828 = vmatmul.bf16.gmra.mxu0 %v1188
      %v1829 = vpop.f32.mrf.mxu0
      %v1830 = vadd.f32 %v1501, %v1829
      %v1831 = vpop.f32.mrf.mxu0
      %v1832 = vadd.f32 %v1503, %v1831
      %1833 = vmatmul.bf16.gmra.mxu0 %v1191
      %v1834 = vpop.f32.mrf.mxu0
      %v1835 = vadd.f32 %v1506, %v1834
      %v1836 = vpop.f32.mrf.mxu0
      %v1837 = vadd.f32 %v1508, %v1836
      %1838 = vmatmul.bf16.gmra.mxu0 %v1194
      %v1839 = vpop.f32.mrf.mxu0
      %v1840 = vadd.f32 %v1511, %v1839
      %v1841 = vpop.f32.mrf.mxu0
      %v1842 = vadd.f32 %v1513, %v1841
      %1843 = vmatmul.bf16.gmra.mxu0 %v1197
      %v1844 = vpop.f32.mrf.mxu0
      %v1845 = vadd.f32 %v1516, %v1844
      %v1846 = vpop.f32.mrf.mxu0
      %v1847 = vadd.f32 %v1518, %v1846
      %1848 = vmatmul.bf16.gmra.mxu0 %v1200
      %v1849 = vpop.f32.mrf.mxu0
      %v1850 = vadd.f32 %v1521, %v1849
      %v1851 = vpop.f32.mrf.mxu0
      %v1852 = vadd.f32 %v1523, %v1851
      %1853 = vmatmul.bf16.gmra.mxu0 %v1203
      %v1854 = vpop.f32.mrf.mxu0
      %v1855 = vadd.f32 %v1526, %v1854
      %v1856 = vpop.f32.mrf.mxu0
      %v1857 = vadd.f32 %v1528, %v1856
      %1858 = vmatmul.bf16.gmra.mxu0 %v1206
      %v1859 = vpop.f32.mrf.mxu0
      %v1860 = vadd.f32 %v1531, %v1859
      %v1861 = vpop.f32.mrf.mxu0
      %v1862 = vadd.f32 %v1533, %v1861
      %1863 = vmatmul.bf16.gmra.mxu0 %v1209
      %v1864 = vpop.f32.mrf.mxu0
      %v1865 = vadd.f32 %v1536, %v1864
      %v1866 = vpop.f32.mrf.mxu0
      %v1867 = vadd.f32 %v1538, %v1866
      %1868 = vmatmul.bf16.gmra.mxu0 %v1212
      %v1869 = vpop.f32.mrf.mxu0
      %v1870 = vadd.f32 %v1541, %v1869
      %v1871 = vpop.f32.mrf.mxu0
      %v1872 = vadd.f32 %v1543, %v1871
      %1873 = vmatmul.bf16.gmra.mxu0 %v1215
      %v1874 = vpop.f32.mrf.mxu0
      %v1875 = vadd.f32 %v1546, %v1874
      %v1876 = vpop.f32.mrf.mxu0
      %v1877 = vadd.f32 %v1548, %v1876
      %1878 = vmatmul.bf16.gmra.mxu0 %v1218
      %v1879 = vpop.f32.mrf.mxu0
      %v1880 = vadd.f32 %v1551, %v1879
      %v1881 = vpop.f32.mrf.mxu0
      %v1882 = vadd.f32 %v1553, %v1881
      %1883 = vdwg.mxu0
      %v1884 = vpack.c.bf16 %v1565, %v1565
      %v1885 = vpack.c.bf16 %v1567, %v1567
      %v1886 = vpack.c.bf16 %v1570, %v1570
      %v1887 = vpack.c.bf16 %v1572, %v1572
      %v1888 = vpack.c.bf16 %v1575, %v1575
      %v1889 = vpack.c.bf16 %v1577, %v1577
      %v1890 = vpack.c.bf16 %v1580, %v1580
      %v1891 = vpack.c.bf16 %v1582, %v1582
      %v1892 = vpack.c.bf16 %v1585, %v1585
      %v1893 = vpack.c.bf16 %v1587, %v1587
      %v1894 = vpack.c.bf16 %v1590, %v1590
      %v1895 = vpack.c.bf16 %v1592, %v1592
      %v1896 = vpack.c.bf16 %v1595, %v1595
      %v1897 = vpack.c.bf16 %v1597, %v1597
      %v1898 = vpack.c.bf16 %v1600, %v1600
      %v1899 = vpack.c.bf16 %v1602, %v1602
      %v1900 = vpack.c.bf16 %v1605, %v1605
      %v1901 = vpack.c.bf16 %v1607, %v1607
      %v1902 = vpack.c.bf16 %v1610, %v1610
      %v1903 = vpack.c.bf16 %v1612, %v1612
      %v1904 = vpack.c.bf16 %v1615, %v1615
      %v1905 = vpack.c.bf16 %v1617, %v1617
      %v1906 = vpack.c.bf16 %v1620, %v1620
      %v1907 = vpack.c.bf16 %v1622, %v1622
      %v1908 = vpack.c.bf16 %v1625, %v1625
      %v1909 = vpack.c.bf16 %v1627, %v1627
      %v1910 = vpack.c.bf16 %v1630, %v1630
      %v1911 = vpack.c.bf16 %v1632, %v1632
      %v1912 = vpack.c.bf16 %v1635, %v1635
      %v1913 = vpack.c.bf16 %v1637, %v1637
      %v1914 = vpack.c.bf16 %v1640, %v1640
      %v1915 = vpack.c.bf16 %v1642, %v1642
      %v1916 = vpack.c.bf16 %v1645, %v1645
      %v1917 = vpack.c.bf16 %v1647, %v1647
      %v1918 = vpack.c.bf16 %v1650, %v1650
      %v1919 = vpack.c.bf16 %v1652, %v1652
      %v1920 = vpack.c.bf16 %v1655, %v1655
      %v1921 = vpack.c.bf16 %v1657, %v1657
      %v1922 = vpack.c.bf16 %v1660, %v1660
      %v1923 = vpack.c.bf16 %v1662, %v1662
      %v1924 = vpack.c.bf16 %v1665, %v1665
      %v1925 = vpack.c.bf16 %v1667, %v1667
      %v1926 = vpack.c.bf16 %v1670, %v1670
      %v1927 = vpack.c.bf16 %v1672, %v1672
      %v1928 = vpack.c.bf16 %v1675, %v1675
      %v1929 = vpack.c.bf16 %v1677, %v1677
      %v1930 = vpack.c.bf16 %v1680, %v1680
      %v1931 = vpack.c.bf16 %v1682, %v1682
      %v1932 = vpack.c.bf16 %v1685, %v1685
      %v1933 = vpack.c.bf16 %v1687, %v1687
      %v1934 = vpack.c.bf16 %v1690, %v1690
      %v1935 = vpack.c.bf16 %v1692, %v1692
      %v1936 = vpack.c.bf16 %v1695, %v1695
      %v1937 = vpack.c.bf16 %v1697, %v1697
      %v1938 = vpack.c.bf16 %v1700, %v1700
      %v1939 = vpack.c.bf16 %v1702, %v1702
      %v1940 = vpack.c.bf16 %v1705, %v1705
      %v1941 = vpack.c.bf16 %v1707, %v1707
      %v1942 = vpack.c.bf16 %v1710, %v1710
      %v1943 = vpack.c.bf16 %v1712, %v1712
      %v1944 = vpack.c.bf16 %v1715, %v1715
      %v1945 = vpack.c.bf16 %v1717, %v1717
      %v1946 = vpack.c.bf16 %v1720, %v1720
      %v1947 = vpack.c.bf16 %v1722, %v1722
      %v1948 = vpack.c.bf16 %v1725, %v1725
      %v1949 = vpack.c.bf16 %v1727, %v1727
      %v1950 = vpack.c.bf16 %v1730, %v1730
      %v1951 = vpack.c.bf16 %v1732, %v1732
      %v1952 = vpack.c.bf16 %v1735, %v1735
      %v1953 = vpack.c.bf16 %v1737, %v1737
      %v1954 = vpack.c.bf16 %v1740, %v1740
      %v1955 = vpack.c.bf16 %v1742, %v1742
      %v1956 = vpack.c.bf16 %v1745, %v1745
      %v1957 = vpack.c.bf16 %v1747, %v1747
      %v1958 = vpack.c.bf16 %v1750, %v1750
      %v1959 = vpack.c.bf16 %v1752, %v1752
      %v1960 = vpack.c.bf16 %v1755, %v1755
      %v1961 = vpack.c.bf16 %v1757, %v1757
      %v1962 = vpack.c.bf16 %v1760, %v1760
      %v1963 = vpack.c.bf16 %v1762, %v1762
      %v1964 = vpack.c.bf16 %v1765, %v1765
      %v1965 = vpack.c.bf16 %v1767, %v1767
      %v1966 = vpack.c.bf16 %v1770, %v1770
      %v1967 = vpack.c.bf16 %v1772, %v1772
      %v1968 = vpack.c.bf16 %v1775, %v1775
      %v1969 = vpack.c.bf16 %v1777, %v1777
      %v1970 = vpack.c.bf16 %v1780, %v1780
      %v1971 = vpack.c.bf16 %v1782, %v1782
      %v1972 = vpack.c.bf16 %v1785, %v1785
      %v1973 = vpack.c.bf16 %v1787, %v1787
      %v1974 = vpack.c.bf16 %v1790, %v1790
      %v1975 = vpack.c.bf16 %v1792, %v1792
      %v1976 = vpack.c.bf16 %v1795, %v1795
      %v1977 = vpack.c.bf16 %v1797, %v1797
      %v1978 = vpack.c.bf16 %v1800, %v1800
      %v1979 = vpack.c.bf16 %v1802, %v1802
      %v1980 = vpack.c.bf16 %v1805, %v1805
      %v1981 = vpack.c.bf16 %v1807, %v1807
      %v1982 = vpack.c.bf16 %v1810, %v1810
      %v1983 = vpack.c.bf16 %v1812, %v1812
      %v1984 = vpack.c.bf16 %v1815, %v1815
      %v1985 = vpack.c.bf16 %v1817, %v1817
      %v1986 = vpack.c.bf16 %v1820, %v1820
      %v1987 = vpack.c.bf16 %v1822, %v1822
      %v1988 = vpack.c.bf16 %v1825, %v1825
      %v1989 = vpack.c.bf16 %v1827, %v1827
      %v1990 = vpack.c.bf16 %v1830, %v1830
      %v1991 = vpack.c.bf16 %v1832, %v1832
      %v1992 = vpack.c.bf16 %v1835, %v1835
      %v1993 = vpack.c.bf16 %v1837, %v1837
      %v1994 = vpack.c.bf16 %v1840, %v1840
      %v1995 = vpack.c.bf16 %v1842, %v1842
      %v1996 = vpack.c.bf16 %v1845, %v1845
      %v1997 = vpack.c.bf16 %v1847, %v1847
      %v1998 = vpack.c.bf16 %v1850, %v1850
      %v1999 = vpack.c.bf16 %v1852, %v1852
      %v2000 = vpack.c.bf16 %v1855, %v1855
      %v2001 = vpack.c.bf16 %v1857, %v1857
      %v2002 = vpack.c.bf16 %v1860, %v1860
      %v2003 = vpack.c.bf16 %v1862, %v1862
      %v2004 = vpack.c.bf16 %v1865, %v1865
      %v2005 = vpack.c.bf16 %v1867, %v1867
      %v2006 = vpack.c.bf16 %v1870, %v1870
      %v2007 = vpack.c.bf16 %v1872, %v1872
      %v2008 = vpack.c.bf16 %v1875, %v1875
      %v2009 = vpack.c.bf16 %v1877, %v1877
      %v2010 = vpack.c.bf16 %v1880, %v1880
      %v2011 = vpack.c.bf16 %v1882, %v1882
      %vm2012 = vcmask 125952
      %2013 = vst.msk [vmem:[%s204] sm:$0xf] %vm2012, %v1884
      %2014 = vst.msk [vmem:[%s204 + $0x4] sm:$0xf] %vm2012, %v1885
      %2015 = vst.msk [vmem:[%s204 + $0x8] sm:$0xf] %vm2012, %v1886
      %2016 = vst.msk [vmem:[%s204 + $0xc] sm:$0xf] %vm2012, %v1887
      %2017 = vst.msk [vmem:[%s204 + $0x10] sm:$0xf] %vm2012, %v1888
      %2018 = vst.msk [vmem:[%s204 + $0x14] sm:$0xf] %vm2012, %v1889
      %2019 = vst.msk [vmem:[%s204 + $0x18] sm:$0xf] %vm2012, %v1890
      %2020 = vst.msk [vmem:[%s204 + $0x1c] sm:$0xf] %vm2012, %v1891
      %2021 = vst.msk [vmem:[%s204 + $0x20] sm:$0xf] %vm2012, %v1892
      %2022 = vst.msk [vmem:[%s204 + $0x24] sm:$0xf] %vm2012, %v1893
      %2023 = vst.msk [vmem:[%s204 + $0x28] sm:$0xf] %vm2012, %v1894
      %2024 = vst.msk [vmem:[%s204 + $0x2c] sm:$0xf] %vm2012, %v1895
      %2025 = vst.msk [vmem:[%s204 + $0x30] sm:$0xf] %vm2012, %v1896
      %2026 = vst.msk [vmem:[%s204 + $0x34] sm:$0xf] %vm2012, %v1897
      %2027 = vst.msk [vmem:[%s204 + $0x38] sm:$0xf] %vm2012, %v1898
      %2028 = vst.msk [vmem:[%s204 + $0x3c] sm:$0xf] %vm2012, %v1899
      %2029 = vst.msk [vmem:[%s204 + $0x40] sm:$0xf] %vm2012, %v1900
      %2030 = vst.msk [vmem:[%s204 + $0x44] sm:$0xf] %vm2012, %v1901
      %2031 = vst.msk [vmem:[%s204 + $0x48] sm:$0xf] %vm2012, %v1902
      %2032 = vst.msk [vmem:[%s204 + $0x4c] sm:$0xf] %vm2012, %v1903
      %2033 = vst.msk [vmem:[%s204 + $0x50] sm:$0xf] %vm2012, %v1904
      %2034 = vst.msk [vmem:[%s204 + $0x54] sm:$0xf] %vm2012, %v1905
      %2035 = vst.msk [vmem:[%s204 + $0x58] sm:$0xf] %vm2012, %v1906
      %2036 = vst.msk [vmem:[%s204 + $0x5c] sm:$0xf] %vm2012, %v1907
      %2037 = vst.msk [vmem:[%s204 + $0x60] sm:$0xf] %vm2012, %v1908
      %2038 = vst.msk [vmem:[%s204 + $0x64] sm:$0xf] %vm2012, %v1909
      %2039 = vst.msk [vmem:[%s204 + $0x68] sm:$0xf] %vm2012, %v1910
      %2040 = vst.msk [vmem:[%s204 + $0x6c] sm:$0xf] %vm2012, %v1911
      %2041 = vst.msk [vmem:[%s204 + $0x70] sm:$0xf] %vm2012, %v1912
      %2042 = vst.msk [vmem:[%s204 + $0x74] sm:$0xf] %vm2012, %v1913
      %2043 = vst.msk [vmem:[%s204 + $0x78] sm:$0xf] %vm2012, %v1914
      %2044 = vst.msk [vmem:[%s204 + $0x7c] sm:$0xf] %vm2012, %v1915
      %2045 = vst.msk [vmem:[%s204 + $0x80] sm:$0xf] %vm2012, %v1916
      %2046 = vst.msk [vmem:[%s204 + $0x84] sm:$0xf] %vm2012, %v1917
      %2047 = vst.msk [vmem:[%s204 + $0x88] sm:$0xf] %vm2012, %v1918
      %2048 = vst.msk [vmem:[%s204 + $0x8c] sm:$0xf] %vm2012, %v1919
      %2049 = vst.msk [vmem:[%s204 + $0x90] sm:$0xf] %vm2012, %v1920
      %2050 = vst.msk [vmem:[%s204 + $0x94] sm:$0xf] %vm2012, %v1921
      %2051 = vst.msk [vmem:[%s204 + $0x98] sm:$0xf] %vm2012, %v1922
      %2052 = vst.msk [vmem:[%s204 + $0x9c] sm:$0xf] %vm2012, %v1923
      %2053 = vst.msk [vmem:[%s204 + $0xa0] sm:$0xf] %vm2012, %v1924
      %2054 = vst.msk [vmem:[%s204 + $0xa4] sm:$0xf] %vm2012, %v1925
      %2055 = vst.msk [vmem:[%s204 + $0xa8] sm:$0xf] %vm2012, %v1926
      %2056 = vst.msk [vmem:[%s204 + $0xac] sm:$0xf] %vm2012, %v1927
      %2057 = vst.msk [vmem:[%s204 + $0xb0] sm:$0xf] %vm2012, %v1928
      %2058 = vst.msk [vmem:[%s204 + $0xb4] sm:$0xf] %vm2012, %v1929
      %2059 = vst.msk [vmem:[%s204 + $0xb8] sm:$0xf] %vm2012, %v1930
      %2060 = vst.msk [vmem:[%s204 + $0xbc] sm:$0xf] %vm2012, %v1931
      %2061 = vst.msk [vmem:[%s204 + $0xc0] sm:$0xf] %vm2012, %v1932
      %2062 = vst.msk [vmem:[%s204 + $0xc4] sm:$0xf] %vm2012, %v1933
      %2063 = vst.msk [vmem:[%s204 + $0xc8] sm:$0xf] %vm2012, %v1934
      %2064 = vst.msk [vmem:[%s204 + $0xcc] sm:$0xf] %vm2012, %v1935
      %2065 = vst.msk [vmem:[%s204 + $0xd0] sm:$0xf] %vm2012, %v1936
      %2066 = vst.msk [vmem:[%s204 + $0xd4] sm:$0xf] %vm2012, %v1937
      %2067 = vst.msk [vmem:[%s204 + $0xd8] sm:$0xf] %vm2012, %v1938
      %2068 = vst.msk [vmem:[%s204 + $0xdc] sm:$0xf] %vm2012, %v1939
      %2069 = vst.msk [vmem:[%s204 + $0xe0] sm:$0xf] %vm2012, %v1940
      %2070 = vst.msk [vmem:[%s204 + $0xe4] sm:$0xf] %vm2012, %v1941
      %2071 = vst.msk [vmem:[%s204 + $0xe8] sm:$0xf] %vm2012, %v1942
      %2072 = vst.msk [vmem:[%s204 + $0xec] sm:$0xf] %vm2012, %v1943
      %2073 = vst.msk [vmem:[%s204 + $0xf0] sm:$0xf] %vm2012, %v1944
      %2074 = vst.msk [vmem:[%s204 + $0xf4] sm:$0xf] %vm2012, %v1945
      %2075 = vst.msk [vmem:[%s204 + $0xf8] sm:$0xf] %vm2012, %v1946
      %2076 = vst.msk [vmem:[%s204 + $0xfc] sm:$0xf] %vm2012, %v1947
      %2077 = vst.msk [vmem:[%s204 + $0x100] sm:$0xf] %vm2012, %v1948
      %2078 = vst.msk [vmem:[%s204 + $0x104] sm:$0xf] %vm2012, %v1949
      %2079 = vst.msk [vmem:[%s204 + $0x108] sm:$0xf] %vm2012, %v1950
      %2080 = vst.msk [vmem:[%s204 + $0x10c] sm:$0xf] %vm2012, %v1951
      %2081 = vst.msk [vmem:[%s204 + $0x110] sm:$0xf] %vm2012, %v1952
      %2082 = vst.msk [vmem:[%s204 + $0x114] sm:$0xf] %vm2012, %v1953
      %2083 = vst.msk [vmem:[%s204 + $0x118] sm:$0xf] %vm2012, %v1954
      %2084 = vst.msk [vmem:[%s204 + $0x11c] sm:$0xf] %vm2012, %v1955
      %2085 = vst.msk [vmem:[%s204 + $0x120] sm:$0xf] %vm2012, %v1956
      %2086 = vst.msk [vmem:[%s204 + $0x124] sm:$0xf] %vm2012, %v1957
      %2087 = vst.msk [vmem:[%s204 + $0x128] sm:$0xf] %vm2012, %v1958
      %2088 = vst.msk [vmem:[%s204 + $0x12c] sm:$0xf] %vm2012, %v1959
      %2089 = vst.msk [vmem:[%s204 + $0x130] sm:$0xf] %vm2012, %v1960
      %2090 = vst.msk [vmem:[%s204 + $0x134] sm:$0xf] %vm2012, %v1961
      %2091 = vst.msk [vmem:[%s204 + $0x138] sm:$0xf] %vm2012, %v1962
      %2092 = vst.msk [vmem:[%s204 + $0x13c] sm:$0xf] %vm2012, %v1963
      %2093 = vst.msk [vmem:[%s204 + $0x140] sm:$0xf] %vm2012, %v1964
      %2094 = vst.msk [vmem:[%s204 + $0x144] sm:$0xf] %vm2012, %v1965
      %2095 = vst.msk [vmem:[%s204 + $0x148] sm:$0xf] %vm2012, %v1966
      %2096 = vst.msk [vmem:[%s204 + $0x14c] sm:$0xf] %vm2012, %v1967
      %2097 = vst.msk [vmem:[%s204 + $0x150] sm:$0xf] %vm2012, %v1968
      %2098 = vst.msk [vmem:[%s204 + $0x154] sm:$0xf] %vm2012, %v1969
      %2099 = vst.msk [vmem:[%s204 + $0x158] sm:$0xf] %vm2012, %v1970
      %2100 = vst.msk [vmem:[%s204 + $0x15c] sm:$0xf] %vm2012, %v1971
      %2101 = vst.msk [vmem:[%s204 + $0x160] sm:$0xf] %vm2012, %v1972
      %2102 = vst.msk [vmem:[%s204 + $0x164] sm:$0xf] %vm2012, %v1973
      %2103 = vst.msk [vmem:[%s204 + $0x168] sm:$0xf] %vm2012, %v1974
      %2104 = vst.msk [vmem:[%s204 + $0x16c] sm:$0xf] %vm2012, %v1975
      %2105 = vst.msk [vmem:[%s204 + $0x170] sm:$0xf] %vm2012, %v1976
      %2106 = vst.msk [vmem:[%s204 + $0x174] sm:$0xf] %vm2012, %v1977
      %2107 = vst.msk [vmem:[%s204 + $0x178] sm:$0xf] %vm2012, %v1978
      %2108 = vst.msk [vmem:[%s204 + $0x17c] sm:$0xf] %vm2012, %v1979
      %2109 = vst.msk [vmem:[%s204 + $0x180] sm:$0xf] %vm2012, %v1980
      %2110 = vst.msk [vmem:[%s204 + $0x184] sm:$0xf] %vm2012, %v1981
      %2111 = vst.msk [vmem:[%s204 + $0x188] sm:$0xf] %vm2012, %v1982
      %2112 = vst.msk [vmem:[%s204 + $0x18c] sm:$0xf] %vm2012, %v1983
      %2113 = vst.msk [vmem:[%s204 + $0x190] sm:$0xf] %vm2012, %v1984
      %2114 = vst.msk [vmem:[%s204 + $0x194] sm:$0xf] %vm2012, %v1985
      %2115 = vst.msk [vmem:[%s204 + $0x198] sm:$0xf] %vm2012, %v1986
      %2116 = vst.msk [vmem:[%s204 + $0x19c] sm:$0xf] %vm2012, %v1987
      %2117 = vst.msk [vmem:[%s204 + $0x1a0] sm:$0xf] %vm2012, %v1988
      %2118 = vst.msk [vmem:[%s204 + $0x1a4] sm:$0xf] %vm2012, %v1989
      %2119 = vst.msk [vmem:[%s204 + $0x1a8] sm:$0xf] %vm2012, %v1990
      %2120 = vst.msk [vmem:[%s204 + $0x1ac] sm:$0xf] %vm2012, %v1991
      %2121 = vst.msk [vmem:[%s204 + $0x1b0] sm:$0xf] %vm2012, %v1992
      %2122 = vst.msk [vmem:[%s204 + $0x1b4] sm:$0xf] %vm2012, %v1993
      %2123 = vst.msk [vmem:[%s204 + $0x1b8] sm:$0xf] %vm2012, %v1994
      %2124 = vst.msk [vmem:[%s204 + $0x1bc] sm:$0xf] %vm2012, %v1995
      %2125 = vst.msk [vmem:[%s204 + $0x1c0] sm:$0xf] %vm2012, %v1996
      %2126 = vst.msk [vmem:[%s204 + $0x1c4] sm:$0xf] %vm2012, %v1997
      %2127 = vst.msk [vmem:[%s204 + $0x1c8] sm:$0xf] %vm2012, %v1998
      %2128 = vst.msk [vmem:[%s204 + $0x1cc] sm:$0xf] %vm2012, %v1999
      %2129 = vst.msk [vmem:[%s204 + $0x1d0] sm:$0xf] %vm2012, %v2000
      %2130 = vst.msk [vmem:[%s204 + $0x1d4] sm:$0xf] %vm2012, %v2001
      %2131 = vst.msk [vmem:[%s204 + $0x1d8] sm:$0xf] %vm2012, %v2002
      %2132 = vst.msk [vmem:[%s204 + $0x1dc] sm:$0xf] %vm2012, %v2003
      %2133 = vst.msk [vmem:[%s204 + $0x1e0] sm:$0xf] %vm2012, %v2004
      %2134 = vst.msk [vmem:[%s204 + $0x1e4] sm:$0xf] %vm2012, %v2005
      %2135 = vst.msk [vmem:[%s204 + $0x1e8] sm:$0xf] %vm2012, %v2006
      %2136 = vst.msk [vmem:[%s204 + $0x1ec] sm:$0xf] %vm2012, %v2007
      %2137 = vst.msk [vmem:[%s204 + $0x1f0] sm:$0xf] %vm2012, %v2008
      %2138 = vst.msk [vmem:[%s204 + $0x1f4] sm:$0xf] %vm2012, %v2009
      %2139 = vst.msk [vmem:[%s204 + $0x1f8] sm:$0xf] %vm2012, %v2010
      %2140 = vst.msk [vmem:[%s204 + $0x1fc] sm:$0xf] %vm2012, %v2011
      %s2141 = smul.u32 128, %s17
      %p2142 = scmp.lt.s32.totalorder %s18, 0
      %s2143 = scalar_select %p2142, %s18, 0
      %p2144 = scmp.lt.s32.totalorder %s2141, 511
      %s2145 = scalar_select %p2144, %s2141, 511
      %s2146 = smul.addr %s2143, 512
      %s2147 = sadd.s32 %s2145, %s2146
      %s2148 = smul.addr %s2147, 4
      %s2149 = scalar_lea.vmem %s2, %s2148
      // Predicated region
      $region29: #{pallas_grouped_matmul.1} parent=27 // pred_check
        %p2150 = pneg %p99
      $region30: #{pallas_grouped_matmul.1} parent=27 // pred_check_branch
        %2152 = sbr.rel (%p2150) target = $region32
      $region31: #{pallas_grouped_matmul.1} parent=27 // pred_region
        %s2153 = smul.u32 128, %s17
      $region32: #{pallas_grouped_matmul.1} parent=27 // pred_fallthru
        _
    $region28: #{pallas_grouped_matmul.1} parent=5 // pred_fallthru
      _
    %p2154 = scmp.le.s32.totalorder 2, %s8
    // Predicated region
    $region33: #{pallas_grouped_matmul.1} parent=5 // pred_check
      %p2155 = pneg %p2154
    $region34: #{pallas_grouped_matmul.1} parent=5 // pred_check_branch
      %2157 = sbr.rel (%p2155) target = $region36
    $region35: #{pallas_grouped_matmul.1} parent=5 // pred_region
      %s2158 = ssub.s32 %s8, 2
      // Predicated region
      $region37: #{pallas_grouped_matmul.1} parent=35 // pred_check
        %p2159 = pneg %p105
      $region38: #{pallas_grouped_matmul.1} parent=35 // pred_check_branch
        %2161 = sbr.rel (%p2159) target = $region40
      $region39: #{pallas_grouped_matmul.1} parent=35 // pred_region
        %s2162 = smul.u32 128, %s19
        %p2163 = scmp.lt.s32.totalorder %s20, 0
        %s2164 = scalar_select %p2163, %s20, 0
        %p2165 = scmp.lt.s32.totalorder %s2162, 511
        %s2166 = scalar_select %p2165, %s2162, 511
        %s2167 = smul.addr %s2164, 512
        %s2168 = sadd.s32 %s2166, %s2167
        %s2169 = smul.addr %s2168, 4
        %s2170 = scalar_lea.vmem %s2, %s2169
      $region40: #{pallas_grouped_matmul.1} parent=35 // pred_fallthru
        _
    $region36: #{pallas_grouped_matmul.1} parent=5 // pred_fallthru
      _
  $region6: #{pallas_grouped_matmul.1} parent=0 // loop_footer
    %s12 = sadd.s32 1, %s8
  $region7: #{pallas_grouped_matmul.1} parent=0 // loop_footer_branch
    %7 = sbr.rel target = $region3
  $region8: #{pallas_grouped_matmul.1} parent=0 // loop_exit
    _

</llo_original>
